<compile_context>
chip_gen: v7x
topology: tpu7x:2x2x1
jax: 0.10.0
libtpu: 0.0.40
codegen_flags: <defaults>
</compile_context>

<pallas_src>
import jax
import jax.numpy as jnp
from jax.experimental import pallas as pl
from jax.experimental.pallas import tpu as pltpu

num_bond_type = 6
num_bond_direction = 3
num_atom_type = 120
num_chirality_tag = 3

EMB_DIM = 32
NUM_LAYER = 3
BN_EPS = 1e-5

LANE = 128
SUBLANE = 8


def _round_up(v, m):
    return ((v + m - 1) // m) * m


def _vmem_limit_bytes():
    """Generation-aware VMEM ceiling: ~80% of physical, clamped to [32, 100] MiB."""
    try:
        cap = getattr(pltpu.get_tpu_info(), "vmem_capacity_bytes", None)
    except Exception:
        cap = None
    if not cap:
        cap = 64 * 1024 * 1024          # conservative fallback (v7x-sized)
    return int(min(max(int(cap * 0.8), 32 * 1024 * 1024), 100 * 1024 * 1024))


# ----------------------------------------------------------------------------
# Fused Pallas kernel: all NUM_LAYER GIN layers + mean-pool, one invocation.
# Everything is resident in VMEM (single-buffered; no grid, no pipelining).
# ----------------------------------------------------------------------------
def fused_gin_kernel(h0_ref, a_ref, eagg_ref, w1_ref, b1_ref, w2_ref, b2_ref,
                     p_ref, pooled_ref, nodes_ref):
    """Per layer l (unrolled):
         agg = A @ h + eagg[l]                      (A incl. self loops, bf16 counts)
         hn  = relu(agg @ W1[l] + b1[l]) @ W2'[l] + b2'[l]   (BN(eval) folded)
         h   = relu(hn).bf16  for l < L-1;   node_rep = hn at l = L-1 (JK='last')
       pooled = P @ node_rep                        (global mean pool, fused)
    """
    a = a_ref[...]                      # [Np, Np] bf16
    h = h0_ref[...]                     # [Np, Dp] bf16
    hn = None
    for l in range(NUM_LAYER):          # static unroll: one LLO schedule for all layers
        # propagate (message + scatter-add) as one lane-dense bf16 MXU matmul
        agg = (jnp.dot(a, h, preferred_element_type=jnp.float32)
               + eagg_ref[l].astype(jnp.float32))
        # GIN MLP: Linear(D, 2D) -> ReLU -> Linear(2D, D), BatchNorm pre-folded
        z = jnp.dot(agg.astype(jnp.bfloat16), w1_ref[l],
                    preferred_element_type=jnp.float32) + b1_ref[l]
        z = jnp.maximum(z, 0.0)
        hn = jnp.dot(z.astype(jnp.bfloat16), w2_ref[l],
                     preferred_element_type=jnp.float32) + b2_ref[l]
        if l < NUM_LAYER - 1:
            h = jnp.maximum(hn, 0.0).astype(jnp.bfloat16)   # F.relu; dropout(0.0) no-op

    nodes_ref[...] = hn                                     # JK == 'last'
    pooled_ref[...] = jnp.dot(p_ref[...], hn.astype(jnp.bfloat16),
                              preferred_element_type=jnp.float32)


def fused_gin_forward(h0, A, eagg, w1, b1, w2, b2, P):
    Np, Dp = h0.shape
    Gp = P.shape[0]
    vmem_spec = pl.BlockSpec(memory_space=pltpu.MemorySpace.VMEM)
    return pl.pallas_call(
        fused_gin_kernel,
        out_shape=(jax.ShapeDtypeStruct((Gp, Dp), jnp.float32),   # pooled
                   jax.ShapeDtypeStruct((Np, Dp), jnp.float32)),  # node_rep
        in_specs=[vmem_spec] * 8,
        out_specs=(vmem_spec, vmem_spec),
        compiler_params=pltpu.CompilerParams(
            vmem_limit_bytes=_vmem_limit_bytes()),
    )(h0, A, eagg, w1, b1, w2, b2, P)


# ----------------------------------------------------------------------------
# Parameter construction (deterministic, synthetic)
# ----------------------------------------------------------------------------
def init_params(key, emb_dim, num_layer):
    def nrm(k, shape, s=0.1):
        return (s * jax.random.normal(k, shape)).astype(jnp.float32)

    keys = jax.random.split(key, 2 + num_layer)
    params = {
        "x_emb1": nrm(keys[0], (num_atom_type, emb_dim)),
        "x_emb2": nrm(keys[1], (num_chirality_tag, emb_dim)),
        "layers": [],
    }
    for l in range(num_layer):
        lk = jax.random.split(keys[2 + l], 8)
        params["layers"].append({
            "edge_emb1": nrm(lk[0], (num_bond_type, emb_dim)),
            "edge_emb2": nrm(lk[1], (num_bond_direction, emb_dim)),
            "W1": nrm(lk[2], (emb_dim, 2 * emb_dim)),
            "b1": nrm(lk[3], (2 * emb_dim,)),
            "W2": nrm(lk[4], (2 * emb_dim, emb_dim)),
            "b2": nrm(lk[5], (emb_dim,)),
            "gamma": 1.0 + nrm(lk[6], (emb_dim,)),
            "beta": nrm(lk[7], (emb_dim,)),
            "running_mean": jnp.zeros((emb_dim,), jnp.float32),
            "running_var": jnp.ones((emb_dim,), jnp.float32),
        })
    return params


# ----------------------------------------------------------------------------
# Forward pass: cheap gather/scatter glue + padding in JAX, hot path in Pallas.
# ----------------------------------------------------------------------------
def gnn_graphmvp_forward(params, x, edge_index, edge_attr, batch, num_graphs):
    N = x.shape[0]
    D = EMB_DIM
    Dp = _round_up(max(D, LANE), LANE)          # lane-dense feature width (128)
    Hp = _round_up(max(2 * D, LANE), LANE)      # lane-dense hidden width   (128)
    Np = _round_up(N, LANE)                     # MXU-friendly node count (mult of 128)
    Gp = _round_up(num_graphs, SUBLANE)

    # node embedding: x_embedding1(x[:,0]) + x_embedding2(x[:,1])
    h0 = params["x_emb1"][x[:, 0]] + params["x_emb2"][x[:, 1]]          # [N, D]
    h0p = jnp.pad(h0, ((0, Np - N), (0, Dp - D))).astype(jnp.bfloat16)

    src, tgt = edge_index[0], edge_index[1]
    diag = jnp.arange(N)

    # dense adjacency incl. self loops, built directly at padded shape:
    # A[i, j] = #edges j -> i (+ 1 on the diagonal of real nodes).
    # counts are small integers -> exact in bf16 (valid up to 256 per entry).
    Ap = (jnp.zeros((Np, Np), jnp.float32)
          .at[tgt, src].add(1.0)
          .at[diag, diag].add(1.0)
          .astype(jnp.bfloat16))

    # per-layer edge-embedding segment-sum (the T @ eemb part of propagate);
    # self-loop attr is [4, 0] -> edge_emb1[4] + edge_emb2[0] added to every real node.
    eagg_l, w1_l, b1_l, w2_l, b2_l = [], [], [], [], []
    for lp in params["layers"]:
        eemb = lp["edge_emb1"][edge_attr[:, 0]] + lp["edge_emb2"][edge_attr[:, 1]]
        self_emb = lp["edge_emb1"][4] + lp["edge_emb2"][0]
        eagg = jnp.zeros((N, D), jnp.float32).at[tgt].add(eemb) + self_emb[None, :]
        eagg_l.append(jnp.pad(eagg, ((0, Np - N), (0, Dp - D))).astype(jnp.bfloat16))

        # fold eval-mode BatchNorm into the second linear layer
        scale = lp["gamma"] / jnp.sqrt(lp["running_var"] + BN_EPS)
        shift = lp["beta"] - lp["running_mean"] * scale
        w2f = lp["W2"] * scale[None, :]
        b2f = lp["b2"] * scale + shift

        w1_l.append(jnp.pad(lp["W1"], ((0, Dp - D), (0, Hp - 2 * D))).astype(jnp.bfloat16))
        b1_l.append(jnp.pad(lp["b1"][None, :], ((0, 0), (0, Hp - 2 * D))))
        w2_l.append(jnp.pad(w2f, ((0, Hp - 2 * D), (0, Dp - D))).astype(jnp.bfloat16))
        b2_l.append(jnp.pad(b2f[None, :], ((0, 0), (0, Dp - D))))

    eagg = jnp.stack(eagg_l)          # [L, Np, Dp] bf16
    w1 = jnp.stack(w1_l)              # [L, Dp, Hp] bf16
    b1 = jnp.stack(b1_l)              # [L, 1, Hp]  f32
    w2 = jnp.stack(w2_l)              # [L, Hp, Dp] bf16
    b2 = jnp.stack(b2_l)              # [L, 1, Dp]  f32

    # global_mean_pool matrix (zero columns for padded nodes, zero rows for padded graphs)
    onehot = (batch[None, :] == jnp.arange(num_graphs)[:, None]).astype(jnp.float32)
    counts = jnp.maximum(onehot.sum(axis=1, keepdims=True), 1.0)
    P = jnp.pad(onehot / counts,
                ((0, Gp - num_graphs), (0, Np - N))).astype(jnp.bfloat16)   # [Gp, Np]

    pooled_p, nodes_p = fused_gin_forward(h0p, Ap, eagg, w1, b1, w2, b2, P)

    # strip lane / row padding (padded node rows of nodes_p are garbage by design)
    return pooled_p[:num_graphs, :D], nodes_p[:N, :D]


# ----------------------------------------------------------------------------
# Demo
# ----------------------------------------------------------------------------
if __name__ == "__main__":
    key = jax.random.PRNGKey(0)
    kp, kx0, kx1, ke, ka0, ka1 = jax.random.split(key, 6)

    N, E, G = 16, 20, 2
    params = init_params(kp, EMB_DIM, NUM_LAYER)

    x = jnp.stack([
        jax.random.randint(kx0, (N,), 0, num_atom_type),
        jax.random.randint(kx1, (N,), 0, num_chirality_tag),
    ], axis=1).astype(jnp.int32)                                          # [N, 2]
    edge_index = jax.random.randint(ke, (2, E), 0, N).astype(jnp.int32)   # [2, E]
    edge_attr = jnp.stack([
        jax.random.randint(ka0, (E,), 0, num_bond_type - 2),  # real bond types 0..3
        jax.random.randint(ka1, (E,), 0, num_bond_direction),
    ], axis=1).astype(jnp.int32)                                          # [E, 2]
    batch = jnp.concatenate([jnp.zeros((N // 2,), jnp.int32),
                             jnp.ones((N - N // 2,), jnp.int32)])         # [N]

    fwd = jax.jit(gnn_graphmvp_forward, static_argnames=("num_graphs",))
    pooled, node_rep = fwd(params, x, edge_index, edge_attr, batch, num_graphs=G)
    pooled = jax.block_until_ready(pooled)
    node_rep = jax.block_until_ready(node_rep)

    assert pooled.shape == (G, EMB_DIM) and node_rep.shape == (N, EMB_DIM)
    assert jnp.all(jnp.isfinite(pooled)) and jnp.all(jnp.isfinite(node_rep))
    print("KERNEL_OK")
</pallas_src>

<mosaic_0001>
module attributes {stable_mosaic.version = 11 : i64} {
  func.func private @main(%arg0: i32) attributes {dimension_semantics = [#tpu.dimension_semantics<core_parallel>], iteration_bounds = array<i64: 2>, tpu.core_type = #tpu.core_type<sc_scalar_subcore>, window_params = []} {
    return
  }
}

module attributes {stable_mosaic.version = 11 : i64} {
  func.func private @main(%arg0: i32) attributes {dimension_semantics = [#tpu.dimension_semantics<core_parallel>], iteration_bounds = array<i64: 2>, tpu.core_type = #tpu.core_type<sc_scalar_subcore>, window_params = []} {
    return
  }
}

module attributes {stable_mosaic.version = 11 : i64} {
  func.func @fused_gin_kernel(%arg0: memref<128x128xbf16, #tpu.memory_space<vmem>>, %arg1: memref<128x128xbf16, #tpu.memory_space<vmem>>, %arg2: memref<3x128x128xbf16, #tpu.memory_space<vmem>>, %arg3: memref<3x128x128xbf16, #tpu.memory_space<vmem>>, %arg4: memref<3x1x128xf32, #tpu.memory_space<vmem>>, %arg5: memref<3x128x128xbf16, #tpu.memory_space<vmem>>, %arg6: memref<3x1x128xf32, #tpu.memory_space<vmem>>, %arg7: memref<8x128xbf16, #tpu.memory_space<vmem>>, %arg8: memref<8x128xf32, #tpu.memory_space<vmem>>, %arg9: memref<128x128xf32, #tpu.memory_space<vmem>>) attributes {dimension_semantics = [], scalar_prefetch = 0 : i64, scratch_operands = 0 : i64, tpu.core_type = #tpu.core_type<tc>} {
    %c0 = arith.constant 0 : index
    %c0_0 = arith.constant 0 : index
    %0 = vector.load %arg1[%c0, %c0_0] : memref<128x128xbf16, #tpu.memory_space<vmem>>, vector<128x128xbf16>
    %c0_1 = arith.constant 0 : index
    %c0_2 = arith.constant 0 : index
    %1 = vector.load %arg0[%c0_1, %c0_2] : memref<128x128xbf16, #tpu.memory_space<vmem>>, vector<128x128xbf16>
    %cst = arith.constant dense<0.000000e+00> : vector<128x128xf32>
    %2 = tpu.matmul %0, %1, %cst {dimension_numbers = #tpu.dot_dimension_numbers<[1], [0], [0], [1], [0, 0, 1, 1], [], []>} : vector<128x128xbf16>, vector<128x128xbf16>, vector<128x128xf32> -> vector<128x128xf32>
    %c0_3 = arith.constant 0 : index
    %c0_4 = arith.constant 0 : index
    %c0_5 = arith.constant 0 : index
    %3 = vector.load %arg2[%c0_3, %c0_4, %c0_5] : memref<3x128x128xbf16, #tpu.memory_space<vmem>>, vector<1x128x128xbf16>
    %4 = vector.shape_cast %3 : vector<1x128x128xbf16> to vector<128x128xbf16>
    %5 = arith.extf %4 : vector<128x128xbf16> to vector<128x128xf32>
    %6 = arith.addf %2, %5 : vector<128x128xf32>
    %7 = arith.truncf %6 : vector<128x128xf32> to vector<128x128xbf16>
    %c0_6 = arith.constant 0 : index
    %c0_7 = arith.constant 0 : index
    %c0_8 = arith.constant 0 : index
    %8 = vector.load %arg3[%c0_6, %c0_7, %c0_8] : memref<3x128x128xbf16, #tpu.memory_space<vmem>>, vector<1x128x128xbf16>
    %9 = vector.shape_cast %8 : vector<1x128x128xbf16> to vector<128x128xbf16>
    %cst_9 = arith.constant dense<0.000000e+00> : vector<128x128xf32>
    %10 = tpu.matmul %7, %9, %cst_9 {dimension_numbers = #tpu.dot_dimension_numbers<[1], [0], [0], [1], [0, 0, 1, 1], [], []>} : vector<128x128xbf16>, vector<128x128xbf16>, vector<128x128xf32> -> vector<128x128xf32>
    %c0_10 = arith.constant 0 : index
    %c0_11 = arith.constant 0 : index
    %c0_12 = arith.constant 0 : index
    %11 = vector.load %arg4[%c0_10, %c0_11, %c0_12] : memref<3x1x128xf32, #tpu.memory_space<vmem>>, vector<1x1x128xf32>
    %12 = vector.shape_cast %11 : vector<1x1x128xf32> to vector<1x128xf32>
    %13 = vector.broadcast %12 : vector<1x128xf32> to vector<128x128xf32>
    %14 = arith.addf %10, %13 : vector<128x128xf32>
    %cst_13 = arith.constant 0.000000e+00 : f32
    %15 = vector.broadcast %cst_13 : f32 to vector<128x128xf32>
    %16 = arith.maximumf %14, %15 : vector<128x128xf32>
    %17 = arith.truncf %16 : vector<128x128xf32> to vector<128x128xbf16>
    %c0_14 = arith.constant 0 : index
    %c0_15 = arith.constant 0 : index
    %c0_16 = arith.constant 0 : index
    %18 = vector.load %arg5[%c0_14, %c0_15, %c0_16] : memref<3x128x128xbf16, #tpu.memory_space<vmem>>, vector<1x128x128xbf16>
    %19 = vector.shape_cast %18 : vector<1x128x128xbf16> to vector<128x128xbf16>
    %cst_17 = arith.constant dense<0.000000e+00> : vector<128x128xf32>
    %20 = tpu.matmul %17, %19, %cst_17 {dimension_numbers = #tpu.dot_dimension_numbers<[1], [0], [0], [1], [0, 0, 1, 1], [], []>} : vector<128x128xbf16>, vector<128x128xbf16>, vector<128x128xf32> -> vector<128x128xf32>
    %c0_18 = arith.constant 0 : index
    %c0_19 = arith.constant 0 : index
    %c0_20 = arith.constant 0 : index
    %21 = vector.load %arg6[%c0_18, %c0_19, %c0_20] : memref<3x1x128xf32, #tpu.memory_space<vmem>>, vector<1x1x128xf32>
    %22 = vector.shape_cast %21 : vector<1x1x128xf32> to vector<1x128xf32>
    %23 = vector.broadcast %22 : vector<1x128xf32> to vector<128x128xf32>
    %24 = arith.addf %20, %23 : vector<128x128xf32>
    %cst_21 = arith.constant 0.000000e+00 : f32
    %25 = vector.broadcast %cst_21 : f32 to vector<128x128xf32>
    %26 = arith.maximumf %24, %25 : vector<128x128xf32>
    %27 = arith.truncf %26 : vector<128x128xf32> to vector<128x128xbf16>
    %cst_22 = arith.constant dense<0.000000e+00> : vector<128x128xf32>
    %28 = tpu.matmul %0, %27, %cst_22 {dimension_numbers = #tpu.dot_dimension_numbers<[1], [0], [0], [1], [0, 0, 1, 1], [], []>} : vector<128x128xbf16>, vector<128x128xbf16>, vector<128x128xf32> -> vector<128x128xf32>
    %c1 = arith.constant 1 : index
    %c0_23 = arith.constant 0 : index
    %c0_24 = arith.constant 0 : index
    %29 = vector.load %arg2[%c1, %c0_23, %c0_24] : memref<3x128x128xbf16, #tpu.memory_space<vmem>>, vector<1x128x128xbf16>
    %30 = vector.shape_cast %29 : vector<1x128x128xbf16> to vector<128x128xbf16>
    %31 = arith.extf %30 : vector<128x128xbf16> to vector<128x128xf32>
    %32 = arith.addf %28, %31 : vector<128x128xf32>
    %33 = arith.truncf %32 : vector<128x128xf32> to vector<128x128xbf16>
    %c1_25 = arith.constant 1 : index
    %c0_26 = arith.constant 0 : index
    %c0_27 = arith.constant 0 : index
    %34 = vector.load %arg3[%c1_25, %c0_26, %c0_27] : memref<3x128x128xbf16, #tpu.memory_space<vmem>>, vector<1x128x128xbf16>
    %35 = vector.shape_cast %34 : vector<1x128x128xbf16> to vector<128x128xbf16>
    %cst_28 = arith.constant dense<0.000000e+00> : vector<128x128xf32>
    %36 = tpu.matmul %33, %35, %cst_28 {dimension_numbers = #tpu.dot_dimension_numbers<[1], [0], [0], [1], [0, 0, 1, 1], [], []>} : vector<128x128xbf16>, vector<128x128xbf16>, vector<128x128xf32> -> vector<128x128xf32>
    %c1_29 = arith.constant 1 : index
    %c0_30 = arith.constant 0 : index
    %c0_31 = arith.constant 0 : index
    %37 = vector.load %arg4[%c1_29, %c0_30, %c0_31] : memref<3x1x128xf32, #tpu.memory_space<vmem>>, vector<1x1x128xf32>
    %38 = vector.shape_cast %37 : vector<1x1x128xf32> to vector<1x128xf32>
    %39 = vector.broadcast %38 : vector<1x128xf32> to vector<128x128xf32>
    %40 = arith.addf %36, %39 : vector<128x128xf32>
    %cst_32 = arith.constant 0.000000e+00 : f32
    %41 = vector.broadcast %cst_32 : f32 to vector<128x128xf32>
    %42 = arith.maximumf %40, %41 : vector<128x128xf32>
    %43 = arith.truncf %42 : vector<128x128xf32> to vector<128x128xbf16>
    %c1_33 = arith.constant 1 : index
    %c0_34 = arith.constant 0 : index
    %c0_35 = arith.constant 0 : index
    %44 = vector.load %arg5[%c1_33, %c0_34, %c0_35] : memref<3x128x128xbf16, #tpu.memory_space<vmem>>, vector<1x128x128xbf16>
    %45 = vector.shape_cast %44 : vector<1x128x128xbf16> to vector<128x128xbf16>
    %cst_36 = arith.constant dense<0.000000e+00> : vector<128x128xf32>
    %46 = tpu.matmul %43, %45, %cst_36 {dimension_numbers = #tpu.dot_dimension_numbers<[1], [0], [0], [1], [0, 0, 1, 1], [], []>} : vector<128x128xbf16>, vector<128x128xbf16>, vector<128x128xf32> -> vector<128x128xf32>
    %c1_37 = arith.constant 1 : index
    %c0_38 = arith.constant 0 : index
    %c0_39 = arith.constant 0 : index
    %47 = vector.load %arg6[%c1_37, %c0_38, %c0_39] : memref<3x1x128xf32, #tpu.memory_space<vmem>>, vector<1x1x128xf32>
    %48 = vector.shape_cast %47 : vector<1x1x128xf32> to vector<1x128xf32>
    %49 = vector.broadcast %48 : vector<1x128xf32> to vector<128x128xf32>
    %50 = arith.addf %46, %49 : vector<128x128xf32>
    %cst_40 = arith.constant 0.000000e+00 : f32
    %51 = vector.broadcast %cst_40 : f32 to vector<128x128xf32>
    %52 = arith.maximumf %50, %51 : vector<128x128xf32>
    %53 = arith.truncf %52 : vector<128x128xf32> to vector<128x128xbf16>
    %cst_41 = arith.constant dense<0.000000e+00> : vector<128x128xf32>
    %54 = tpu.matmul %0, %53, %cst_41 {dimension_numbers = #tpu.dot_dimension_numbers<[1], [0], [0], [1], [0, 0, 1, 1], [], []>} : vector<128x128xbf16>, vector<128x128xbf16>, vector<128x128xf32> -> vector<128x128xf32>
    %c2 = arith.constant 2 : index
    %c0_42 = arith.constant 0 : index
    %c0_43 = arith.constant 0 : index
    %55 = vector.load %arg2[%c2, %c0_42, %c0_43] : memref<3x128x128xbf16, #tpu.memory_space<vmem>>, vector<1x128x128xbf16>
    %56 = vector.shape_cast %55 : vector<1x128x128xbf16> to vector<128x128xbf16>
    %57 = arith.extf %56 : vector<128x128xbf16> to vector<128x128xf32>
    %58 = arith.addf %54, %57 : vector<128x128xf32>
    %59 = arith.truncf %58 : vector<128x128xf32> to vector<128x128xbf16>
    %c2_44 = arith.constant 2 : index
    %c0_45 = arith.constant 0 : index
    %c0_46 = arith.constant 0 : index
    %60 = vector.load %arg3[%c2_44, %c0_45, %c0_46] : memref<3x128x128xbf16, #tpu.memory_space<vmem>>, vector<1x128x128xbf16>
    %61 = vector.shape_cast %60 : vector<1x128x128xbf16> to vector<128x128xbf16>
    %cst_47 = arith.constant dense<0.000000e+00> : vector<128x128xf32>
    %62 = tpu.matmul %59, %61, %cst_47 {dimension_numbers = #tpu.dot_dimension_numbers<[1], [0], [0], [1], [0, 0, 1, 1], [], []>} : vector<128x128xbf16>, vector<128x128xbf16>, vector<128x128xf32> -> vector<128x128xf32>
    %c2_48 = arith.constant 2 : index
    %c0_49 = arith.constant 0 : index
    %c0_50 = arith.constant 0 : index
    %63 = vector.load %arg4[%c2_48, %c0_49, %c0_50] : memref<3x1x128xf32, #tpu.memory_space<vmem>>, vector<1x1x128xf32>
    %64 = vector.shape_cast %63 : vector<1x1x128xf32> to vector<1x128xf32>
    %65 = vector.broadcast %64 : vector<1x128xf32> to vector<128x128xf32>
    %66 = arith.addf %62, %65 : vector<128x128xf32>
    %cst_51 = arith.constant 0.000000e+00 : f32
    %67 = vector.broadcast %cst_51 : f32 to vector<128x128xf32>
    %68 = arith.maximumf %66, %67 : vector<128x128xf32>
    %69 = arith.truncf %68 : vector<128x128xf32> to vector<128x128xbf16>
    %c2_52 = arith.constant 2 : index
    %c0_53 = arith.constant 0 : index
    %c0_54 = arith.constant 0 : index
    %70 = vector.load %arg5[%c2_52, %c0_53, %c0_54] : memref<3x128x128xbf16, #tpu.memory_space<vmem>>, vector<1x128x128xbf16>
    %71 = vector.shape_cast %70 : vector<1x128x128xbf16> to vector<128x128xbf16>
    %cst_55 = arith.constant dense<0.000000e+00> : vector<128x128xf32>
    %72 = tpu.matmul %69, %71, %cst_55 {dimension_numbers = #tpu.dot_dimension_numbers<[1], [0], [0], [1], [0, 0, 1, 1], [], []>} : vector<128x128xbf16>, vector<128x128xbf16>, vector<128x128xf32> -> vector<128x128xf32>
    %c2_56 = arith.constant 2 : index
    %c0_57 = arith.constant 0 : index
    %c0_58 = arith.constant 0 : index
    %73 = vector.load %arg6[%c2_56, %c0_57, %c0_58] : memref<3x1x128xf32, #tpu.memory_space<vmem>>, vector<1x1x128xf32>
    %74 = vector.shape_cast %73 : vector<1x1x128xf32> to vector<1x128xf32>
    %75 = vector.broadcast %74 : vector<1x128xf32> to vector<128x128xf32>
    %76 = arith.addf %72, %75 : vector<128x128xf32>
    %c0_59 = arith.constant 0 : index
    %c0_60 = arith.constant 0 : index
    %77 = vector.load %arg9[%c0_59, %c0_60] : memref<128x128xf32, #tpu.memory_space<vmem>>, vector<128x128xf32>
    tpu.vector_store %arg9[%c0_59, %c0_60], %76 {strides = array<i32>} : memref<128x128xf32, #tpu.memory_space<vmem>>, vector<128x128xf32>,
    %c0_61 = arith.constant 0 : index
    %c0_62 = arith.constant 0 : index
    %78 = vector.load %arg7[%c0_61, %c0_62] : memref<8x128xbf16, #tpu.memory_space<vmem>>, vector<8x128xbf16>
    %79 = arith.truncf %76 : vector<128x128xf32> to vector<128x128xbf16>
    %cst_63 = arith.constant dense<0.000000e+00> : vector<8x128xf32>
    %80 = tpu.matmul %78, %79, %cst_63 {dimension_numbers = #tpu.dot_dimension_numbers<[1], [0], [0], [1], [0, 0, 1, 1], [], []>} : vector<8x128xbf16>, vector<128x128xbf16>, vector<8x128xf32> -> vector<8x128xf32>
    %c0_64 = arith.constant 0 : index
    %c0_65 = arith.constant 0 : index
    %81 = vector.load %arg8[%c0_64, %c0_65] : memref<8x128xf32, #tpu.memory_space<vmem>>, vector<8x128xf32>
    tpu.vector_store %arg8[%c0_64, %c0_65], %80 {strides = array<i32>} : memref<8x128xf32, #tpu.memory_space<vmem>>, vector<8x128xf32>,
    return
  }
}

</mosaic_0001>

<llo_original>
// kernel: gnn_graphmvp_forward.1
$region0: #{gnn_graphmvp_forward.1}
  #allocation0 [shape = 'u32[]', space=smem, size = 0x4, offset = 0x4, fixed_abs, tag = 'smem constant byte address 0x4 - core index']
  #allocation1 [shape = 'u32[144,128]{1,0:T(1,128)}', space=vmem, size = 0x12000, scoped, tag = 'internal scratch']
  %s0 = inlined_call_operand.vmem [shape: bf16[128,128], index: 0, kind: input, shape index: {}]
  %s1 = inlined_call_operand.vmem [shape: bf16[128,128], index: 1, kind: input, shape index: {}]
  %s2 = inlined_call_operand.vmem [shape: bf16[3,128,128], index: 2, kind: input, shape index: {}]
  %s3 = inlined_call_operand.vmem [shape: bf16[3,128,128], index: 3, kind: input, shape index: {}]
  %s4 = inlined_call_operand.vmem [shape: f32[3,1,128], index: 4, kind: input, shape index: {}]
  %s5 = inlined_call_operand.vmem [shape: bf16[3,128,128], index: 5, kind: input, shape index: {}]
  %s6 = inlined_call_operand.vmem [shape: f32[3,1,128], index: 6, kind: input, shape index: {}]
  %s7 = inlined_call_operand.vmem [shape: bf16[8,128], index: 7, kind: input, shape index: {}]
  %s8 = inlined_call_operand.vmem [shape: f32[8,128], index: 8, kind: output, shape index: {0}]
  %s9 = inlined_call_operand.vmem [shape: f32[128,128], index: 9, kind: output, shape index: {1}]
  %10 = xla_tuple %s8, %s9
  %s11 = sld [smem:[#allocation0]]
  $region50: #{gnn_graphmvp_forward.1} parent=0
    _
  %s13 = ssub.s32 1, %s11
  %s14 = scalar_select 0, %s13, %s11
  // Predicated region
  $region2: #{gnn_graphmvp_forward.1} parent=0 // pred_check
    _
  $region3: #{gnn_graphmvp_forward.1} parent=0 // pred_check_branch
    %16 = sbr.rel (0) target = $region5
  $region4: #{gnn_graphmvp_forward.1} parent=0 // pred_region
    _
  $region5: #{gnn_graphmvp_forward.1} parent=0 // pred_fallthru
    _
  // Predicated region
  $region6: #{gnn_graphmvp_forward.1} parent=0 // pred_check
    _
  $region7: #{gnn_graphmvp_forward.1} parent=0 // pred_check_branch
    %18 = sbr.rel (0) target = $region9
  $region8: #{gnn_graphmvp_forward.1} parent=0 // pred_region
    _
  $region9: #{gnn_graphmvp_forward.1} parent=0 // pred_fallthru
    _
  // Predicated region
  $region10: #{gnn_graphmvp_forward.1} parent=0 // pred_check
    _
  $region11: #{gnn_graphmvp_forward.1} parent=0 // pred_check_branch
    %20 = sbr.rel (0) target = $region13
  $region12: #{gnn_graphmvp_forward.1} parent=0 // pred_region
    _
  $region13: #{gnn_graphmvp_forward.1} parent=0 // pred_fallthru
    _
  // Predicated region
  $region14: #{gnn_graphmvp_forward.1} parent=0 // pred_check
    _
  $region15: #{gnn_graphmvp_forward.1} parent=0 // pred_check_branch
    %22 = sbr.rel (0) target = $region17
  $region16: #{gnn_graphmvp_forward.1} parent=0 // pred_region
    _
  $region17: #{gnn_graphmvp_forward.1} parent=0 // pred_fallthru
    _
  // Predicated region
  $region18: #{gnn_graphmvp_forward.1} parent=0 // pred_check
    _
  $region19: #{gnn_graphmvp_forward.1} parent=0 // pred_check_branch
    %24 = sbr.rel (0) target = $region21
  $region20: #{gnn_graphmvp_forward.1} parent=0 // pred_region
    _
  $region21: #{gnn_graphmvp_forward.1} parent=0 // pred_fallthru
    _
  // Predicated region
  $region22: #{gnn_graphmvp_forward.1} parent=0 // pred_check
    _
  $region23: #{gnn_graphmvp_forward.1} parent=0 // pred_check_branch
    %26 = sbr.rel (0) target = $region25
  $region24: #{gnn_graphmvp_forward.1} parent=0 // pred_region
    _
  $region25: #{gnn_graphmvp_forward.1} parent=0 // pred_fallthru
    _
  // Predicated region
  $region26: #{gnn_graphmvp_forward.1} parent=0 // pred_check
    _
  $region27: #{gnn_graphmvp_forward.1} parent=0 // pred_check_branch
    %28 = sbr.rel (0) target = $region29
  $region28: #{gnn_graphmvp_forward.1} parent=0 // pred_region
    _
  $region29: #{gnn_graphmvp_forward.1} parent=0 // pred_fallthru
    _
  // Predicated region
  $region30: #{gnn_graphmvp_forward.1} parent=0 // pred_check
    _
  $region31: #{gnn_graphmvp_forward.1} parent=0 // pred_check_branch
    %30 = sbr.rel (0) target = $region33
  $region32: #{gnn_graphmvp_forward.1} parent=0 // pred_region
    _
  $region33: #{gnn_graphmvp_forward.1} parent=0 // pred_fallthru
    _
  %v32 = vld [vmem:[%s1] sm:$0xf]
  %v33 = vld [vmem:[%s1 + $0x4] sm:$0xf]
  %v34 = vld [vmem:[%s1 + $0x8] sm:$0xf]
  %v35 = vld [vmem:[%s1 + $0xc] sm:$0xf]
  %v36 = vld [vmem:[%s1 + $0x10] sm:$0xf]
  %v37 = vld [vmem:[%s1 + $0x14] sm:$0xf]
  %v38 = vld [vmem:[%s1 + $0x18] sm:$0xf]
  %v39 = vld [vmem:[%s1 + $0x1c] sm:$0xf]
  %v40 = vld [vmem:[%s1 + $0x20] sm:$0xf]
  %v41 = vld [vmem:[%s1 + $0x24] sm:$0xf]
  %v42 = vld [vmem:[%s1 + $0x28] sm:$0xf]
  %v43 = vld [vmem:[%s1 + $0x2c] sm:$0xf]
  %v44 = vld [vmem:[%s1 + $0x30] sm:$0xf]
  %v45 = vld [vmem:[%s1 + $0x34] sm:$0xf]
  %v46 = vld [vmem:[%s1 + $0x38] sm:$0xf]
  %v47 = vld [vmem:[%s1 + $0x3c] sm:$0xf]
  %v48 = vld [vmem:[%s0] sm:$0xf]
  %v49 = vld [vmem:[%s0 + $0x4] sm:$0xf]
  %v50 = vld [vmem:[%s0 + $0x8] sm:$0xf]
  %v51 = vld [vmem:[%s0 + $0xc] sm:$0xf]
  %v52 = vld [vmem:[%s0 + $0x10] sm:$0xf]
  %v53 = vld [vmem:[%s0 + $0x14] sm:$0xf]
  %v54 = vld [vmem:[%s0 + $0x18] sm:$0xf]
  %v55 = vld [vmem:[%s0 + $0x1c] sm:$0xf]
  %v56 = vld [vmem:[%s0 + $0x20] sm:$0xf]
  %v57 = vld [vmem:[%s0 + $0x24] sm:$0xf]
  %v58 = vld [vmem:[%s0 + $0x28] sm:$0xf]
  %v59 = vld [vmem:[%s0 + $0x2c] sm:$0xf]
  %v60 = vld [vmem:[%s0 + $0x30] sm:$0xf]
  %v61 = vld [vmem:[%s0 + $0x34] sm:$0xf]
  %v62 = vld [vmem:[%s0 + $0x38] sm:$0xf]
  %v63 = vld [vmem:[%s0 + $0x3c] sm:$0xf]
  %v64 = vld [vmem:[%s2] sm:$0xf]
  %v65 = vld [vmem:[%s2 + $0x4] sm:$0xf]
  %v66 = vld [vmem:[%s2 + $0x8] sm:$0xf]
  %v67 = vld [vmem:[%s2 + $0xc] sm:$0xf]
  %v68 = vld [vmem:[%s2 + $0x10] sm:$0xf]
  %v69 = vld [vmem:[%s2 + $0x14] sm:$0xf]
  %v70 = vld [vmem:[%s2 + $0x18] sm:$0xf]
  %v71 = vld [vmem:[%s2 + $0x1c] sm:$0xf]
  %v72 = vld [vmem:[%s2 + $0x20] sm:$0xf]
  %v73 = vld [vmem:[%s2 + $0x24] sm:$0xf]
  %v74 = vld [vmem:[%s2 + $0x28] sm:$0xf]
  %v75 = vld [vmem:[%s2 + $0x2c] sm:$0xf]
  %v76 = vld [vmem:[%s2 + $0x30] sm:$0xf]
  %v77 = vld [vmem:[%s2 + $0x34] sm:$0xf]
  %v78 = vld [vmem:[%s2 + $0x38] sm:$0xf]
  %v79 = vld [vmem:[%s2 + $0x3c] sm:$0xf]
  %v80 = vunpack.c.l.bf16 %v64
  %v81 = vunpack.c.l.bf16 %v65
  %v82 = vunpack.c.l.bf16 %v66
  %v83 = vunpack.c.l.bf16 %v67
  %v84 = vunpack.c.l.bf16 %v68
  %v85 = vunpack.c.l.bf16 %v69
  %v86 = vunpack.c.l.bf16 %v70
  %v87 = vunpack.c.l.bf16 %v71
  %v88 = vunpack.c.l.bf16 %v72
  %v89 = vunpack.c.l.bf16 %v73
  %v90 = vunpack.c.l.bf16 %v74
  %v91 = vunpack.c.l.bf16 %v75
  %v92 = vunpack.c.l.bf16 %v76
  %v93 = vunpack.c.l.bf16 %v77
  %v94 = vunpack.c.l.bf16 %v78
  %v95 = vunpack.c.l.bf16 %v79
  %v112 = vunpack.c.l.b16 %v32
  %v113 = vunpack.c.l.b16 %v33
  %v114 = vunpack.c.l.b16 %v34
  %v115 = vunpack.c.l.b16 %v35
  %v116 = vunpack.c.l.b16 %v36
  %v117 = vunpack.c.l.b16 %v37
  %v118 = vunpack.c.l.b16 %v38
  %v119 = vunpack.c.l.b16 %v39
  %v120 = vunpack.c.l.b16 %v40
  %v121 = vunpack.c.l.b16 %v41
  %v122 = vunpack.c.l.b16 %v42
  %v123 = vunpack.c.l.b16 %v43
  %v124 = vunpack.c.l.b16 %v44
  %v125 = vunpack.c.l.b16 %v45
  %v126 = vunpack.c.l.b16 %v46
  %v127 = vunpack.c.l.b16 %v47
  %v128 = vpack.c.b16 %v113, %v112
  %v129 = vpack.c.b16 %v115, %v114
  %v130 = vpack.c.b16 %v117, %v116
  %v131 = vpack.c.b16 %v119, %v118
  %v132 = vpack.c.b16 %v121, %v120
  %v133 = vpack.c.b16 %v123, %v122
  %v134 = vpack.c.b16 %v125, %v124
  %v135 = vpack.c.b16 %v127, %v126
  %v160 = vunpack.c.l.b16 %v48
  %v161 = vunpack.c.l.b16 %v49
  %v162 = vunpack.c.l.b16 %v50
  %v163 = vunpack.c.l.b16 %v51
  %v164 = vunpack.c.l.b16 %v52
  %v165 = vunpack.c.l.b16 %v53
  %v166 = vunpack.c.l.b16 %v54
  %v167 = vunpack.c.l.b16 %v55
  %v168 = vunpack.c.l.b16 %v56
  %v169 = vunpack.c.l.b16 %v57
  %v170 = vunpack.c.l.b16 %v58
  %v171 = vunpack.c.l.b16 %v59
  %v172 = vunpack.c.l.b16 %v60
  %v173 = vunpack.c.l.b16 %v61
  %v174 = vunpack.c.l.b16 %v62
  %v175 = vunpack.c.l.b16 %v63
  %v176 = vpack.c.b16 %v161, %v160
  %v177 = vpack.c.b16 %v163, %v162
  %v178 = vpack.c.b16 %v165, %v164
  %v179 = vpack.c.b16 %v167, %v166
  %v180 = vpack.c.b16 %v169, %v168
  %v181 = vpack.c.b16 %v171, %v170
  %v182 = vpack.c.b16 %v173, %v172
  %v183 = vpack.c.b16 %v175, %v174
  %192 = vmatprep.subr.bf16.mxu0 0
  %193 = vmatpush1.bf16.msra.mxu0 %v176
  %194 = vmatprep.subr.bf16.mxu0 0
  %195 = vmatpush1.bf16.msra.mxu0 %v177
  %196 = vmatprep.subr.bf16.mxu0 0
  %197 = vmatpush1.bf16.msra.mxu0 %v178
  %198 = vmatprep.subr.bf16.mxu0 0
  %199 = vmatpush1.bf16.msra.mxu0 %v179
  %200 = vmatprep.subr.bf16.mxu0 0
  %201 = vmatpush1.bf16.msra.mxu0 %v180
  %202 = vmatprep.subr.bf16.mxu0 0
  %203 = vmatpush1.bf16.msra.mxu0 %v181
  %204 = vmatprep.subr.bf16.mxu0 0
  %205 = vmatpush1.bf16.msra.mxu0 %v182
  %206 = vmatprep.subr.bf16.mxu0 0
  %207 = vmatpush1.bf16.msra.mxu0 %v183
  %208 = vmatprep.subr.bf16.mxu0 0
  %209 = vmatpush1.bf16.msra.mxu0 0
  %210 = vmatprep.subr.bf16.mxu0 0
  %211 = vmatpush1.bf16.msra.mxu0 0
  %212 = vmatprep.subr.bf16.mxu0 0
  %213 = vmatpush1.bf16.msra.mxu0 0
  %214 = vmatprep.subr.bf16.mxu0 0
  %215 = vmatpush1.bf16.msra.mxu0 0
  %216 = vmatprep.subr.bf16.mxu0 0
  %217 = vmatpush1.bf16.msra.mxu0 0
  %218 = vmatprep.subr.bf16.mxu0 0
  %219 = vmatpush1.bf16.msra.mxu0 0
  %220 = vmatprep.subr.bf16.mxu0 0
  %221 = vmatpush1.bf16.msra.mxu0 0
  %222 = vmatprep.subr.bf16.mxu0 0
  %223 = vmatpush1.bf16.msra.mxu0 0
  %224 = vmatprep.mubr.bf16.mxu0 0
  %225 = vmatmul.mubr.bf16.gmra.mrb[0].mxu0 %v128
  %v226 = vpop.f32.mrb[0].mxu0
  %v227 = vadd.f32 %v80, %v226
  %v228 = vpop.f32.mrb[0].mxu0
  %v229 = vpop.f32.mrb[0].mxu0
  %v230 = vadd.f32 %v81, %v229
  %v231 = vpop.f32.mrb[0].mxu0
  %232 = vmatprep.mubr.bf16.mxu0 0
  %233 = vmatmul.mubr.bf16.gmra.mrb[0].mxu0 %v129
  %v234 = vpop.f32.mrb[0].mxu0
  %v235 = vadd.f32 %v82, %v234
  %v236 = vpop.f32.mrb[0].mxu0
  %v237 = vpop.f32.mrb[0].mxu0
  %v238 = vadd.f32 %v83, %v237
  %v239 = vpop.f32.mrb[0].mxu0
  %240 = vmatprep.mubr.bf16.mxu0 0
  %241 = vmatmul.mubr.bf16.gmra.mrb[0].mxu0 %v130
  %v242 = vpop.f32.mrb[0].mxu0
  %v243 = vadd.f32 %v84, %v242
  %v244 = vpop.f32.mrb[0].mxu0
  %v245 = vpop.f32.mrb[0].mxu0
  %v246 = vadd.f32 %v85, %v245
  %v247 = vpop.f32.mrb[0].mxu0
  %248 = vmatprep.mubr.bf16.mxu0 0
  %249 = vmatmul.mubr.bf16.gmra.mrb[0].mxu0 %v131
  %v250 = vpop.f32.mrb[0].mxu0
  %v251 = vadd.f32 %v86, %v250
  %v252 = vpop.f32.mrb[0].mxu0
  %v253 = vpop.f32.mrb[0].mxu0
  %v254 = vadd.f32 %v87, %v253
  %v255 = vpop.f32.mrb[0].mxu0
  %256 = vmatprep.mubr.bf16.mxu0 0
  %257 = vmatmul.mubr.bf16.gmra.mrb[0].mxu0 %v132
  %v258 = vpop.f32.mrb[0].mxu0
  %v259 = vadd.f32 %v88, %v258
  %v260 = vpop.f32.mrb[0].mxu0
  %v261 = vpop.f32.mrb[0].mxu0
  %v262 = vadd.f32 %v89, %v261
  %v263 = vpop.f32.mrb[0].mxu0
  %264 = vmatprep.mubr.bf16.mxu0 0
  %265 = vmatmul.mubr.bf16.gmra.mrb[0].mxu0 %v133
  %v266 = vpop.f32.mrb[0].mxu0
  %v267 = vadd.f32 %v90, %v266
  %v268 = vpop.f32.mrb[0].mxu0
  %v269 = vpop.f32.mrb[0].mxu0
  %v270 = vadd.f32 %v91, %v269
  %v271 = vpop.f32.mrb[0].mxu0
  %272 = vmatprep.mubr.bf16.mxu0 0
  %273 = vmatmul.mubr.bf16.gmra.mrb[0].mxu0 %v134
  %v274 = vpop.f32.mrb[0].mxu0
  %v275 = vadd.f32 %v92, %v274
  %v276 = vpop.f32.mrb[0].mxu0
  %v277 = vpop.f32.mrb[0].mxu0
  %v278 = vadd.f32 %v93, %v277
  %v279 = vpop.f32.mrb[0].mxu0
  %280 = vmatprep.mubr.bf16.mxu0 0
  %281 = vmatmul.mubr.bf16.gmra.mrb[0].mxu0 %v135
  %v282 = vpop.f32.mrb[0].mxu0
  %v283 = vadd.f32 %v94, %v282
  %v284 = vpop.f32.mrb[0].mxu0
  %v285 = vpop.f32.mrb[0].mxu0
  %v286 = vadd.f32 %v95, %v285
  %v287 = vpop.f32.mrb[0].mxu0
  %288 = vdwg.mxu0
  %v289 = vpack.c.bf16 %v230, %v227
  %v290 = vpack.c.bf16 %v238, %v235
  %v291 = vpack.c.bf16 %v246, %v243
  %v292 = vpack.c.bf16 %v254, %v251
  %v293 = vpack.c.bf16 %v262, %v259
  %v294 = vpack.c.bf16 %v270, %v267
  %v295 = vpack.c.bf16 %v278, %v275
  %v296 = vpack.c.bf16 %v286, %v283
  %v297 = vld [vmem:[%s3] sm:$0xf]
  %v298 = vld [vmem:[%s3 + $0x4] sm:$0xf]
  %v299 = vld [vmem:[%s3 + $0x8] sm:$0xf]
  %v300 = vld [vmem:[%s3 + $0xc] sm:$0xf]
  %v301 = vld [vmem:[%s3 + $0x10] sm:$0xf]
  %v302 = vld [vmem:[%s3 + $0x14] sm:$0xf]
  %v303 = vld [vmem:[%s3 + $0x18] sm:$0xf]
  %v304 = vld [vmem:[%s3 + $0x1c] sm:$0xf]
  %v305 = vld [vmem:[%s3 + $0x20] sm:$0xf]
  %v306 = vld [vmem:[%s3 + $0x24] sm:$0xf]
  %v307 = vld [vmem:[%s3 + $0x28] sm:$0xf]
  %v308 = vld [vmem:[%s3 + $0x2c] sm:$0xf]
  %v309 = vld [vmem:[%s3 + $0x30] sm:$0xf]
  %v310 = vld [vmem:[%s3 + $0x34] sm:$0xf]
  %v311 = vld [vmem:[%s3 + $0x38] sm:$0xf]
  %v312 = vld [vmem:[%s3 + $0x3c] sm:$0xf]
  %v313 = vld [vmem:[%s4] sm:$0x1]
  %v315 = vlaneseq
  %v316 = vshrl.u32 %v315, 7
  %v317 = vsub.s32 0, %v316
  %v318 = vrot.slane %v313, %v317
  %v336 = vunpack.c.l.b16 %v297
  %v337 = vunpack.c.l.b16 %v298
  %v338 = vunpack.c.l.b16 %v299
  %v339 = vunpack.c.l.b16 %v300
  %v340 = vunpack.c.l.b16 %v301
  %v341 = vunpack.c.l.b16 %v302
  %v342 = vunpack.c.l.b16 %v303
  %v343 = vunpack.c.l.b16 %v304
  %v344 = vunpack.c.l.b16 %v305
  %v345 = vunpack.c.l.b16 %v306
  %v346 = vunpack.c.l.b16 %v307
  %v347 = vunpack.c.l.b16 %v308
  %v348 = vunpack.c.l.b16 %v309
  %v349 = vunpack.c.l.b16 %v310
  %v350 = vunpack.c.l.b16 %v311
  %v351 = vunpack.c.l.b16 %v312
  %v352 = vpack.c.b16 %v337, %v336
  %v353 = vpack.c.b16 %v339, %v338
  %v354 = vpack.c.b16 %v341, %v340
  %v355 = vpack.c.b16 %v343, %v342
  %v356 = vpack.c.b16 %v345, %v344
  %v357 = vpack.c.b16 %v347, %v346
  %v358 = vpack.c.b16 %v349, %v348
  %v359 = vpack.c.b16 %v351, %v350
  %368 = vmatprep.subr.bf16.mxu0 0
  %369 = vmatpush1.bf16.msra.mxu0 %v352
  %370 = vmatprep.subr.bf16.mxu0 0
  %371 = vmatpush1.bf16.msra.mxu0 %v353
  %372 = vmatprep.subr.bf16.mxu0 0
  %373 = vmatpush1.bf16.msra.mxu0 %v354
  %374 = vmatprep.subr.bf16.mxu0 0
  %375 = vmatpush1.bf16.msra.mxu0 %v355
  %376 = vmatprep.subr.bf16.mxu0 0
  %377 = vmatpush1.bf16.msra.mxu0 %v356
  %378 = vmatprep.subr.bf16.mxu0 0
  %379 = vmatpush1.bf16.msra.mxu0 %v357
  %380 = vmatprep.subr.bf16.mxu0 0
  %381 = vmatpush1.bf16.msra.mxu0 %v358
  %382 = vmatprep.subr.bf16.mxu0 0
  %383 = vmatpush1.bf16.msra.mxu0 %v359
  %384 = vmatprep.subr.bf16.mxu0 0
  %385 = vmatpush1.bf16.msra.mxu0 0
  %386 = vmatprep.subr.bf16.mxu0 0
  %387 = vmatpush1.bf16.msra.mxu0 0
  %388 = vmatprep.subr.bf16.mxu0 0
  %389 = vmatpush1.bf16.msra.mxu0 0
  %390 = vmatprep.subr.bf16.mxu0 0
  %391 = vmatpush1.bf16.msra.mxu0 0
  %392 = vmatprep.subr.bf16.mxu0 0
  %393 = vmatpush1.bf16.msra.mxu0 0
  %394 = vmatprep.subr.bf16.mxu0 0
  %395 = vmatpush1.bf16.msra.mxu0 0
  %396 = vmatprep.subr.bf16.mxu0 0
  %397 = vmatpush1.bf16.msra.mxu0 0
  %398 = vmatprep.subr.bf16.mxu0 0
  %399 = vmatpush1.bf16.msra.mxu0 0
  %400 = vmatprep.mubr.bf16.mxu0 0
  %401 = vmatmul.mubr.bf16.gmra.mrb[0].mxu0 %v289
  %v402 = vpop.f32.mrb[0].mxu0
  %v403 = vadd.f32 %v318, %v402
  %v404 = vpop.f32.mrb[0].mxu0
  %v405 = vpop.f32.mrb[0].mxu0
  %v406 = vadd.f32 %v318, %v405
  %v407 = vpop.f32.mrb[0].mxu0
  %408 = vmatprep.mubr.bf16.mxu0 0
  %409 = vmatmul.mubr.bf16.gmra.mrb[0].mxu0 %v290
  %v410 = vpop.f32.mrb[0].mxu0
  %v411 = vadd.f32 %v318, %v410
  %v412 = vpop.f32.mrb[0].mxu0
  %v413 = vpop.f32.mrb[0].mxu0
  %v414 = vadd.f32 %v318, %v413
  %v415 = vpop.f32.mrb[0].mxu0
  %416 = vmatprep.mubr.bf16.mxu0 0
  %417 = vmatmul.mubr.bf16.gmra.mrb[0].mxu0 %v291
  %v418 = vpop.f32.mrb[0].mxu0
  %v419 = vadd.f32 %v318, %v418
  %v420 = vpop.f32.mrb[0].mxu0
  %v421 = vpop.f32.mrb[0].mxu0
  %v422 = vadd.f32 %v318, %v421
  %v423 = vpop.f32.mrb[0].mxu0
  %424 = vmatprep.mubr.bf16.mxu0 0
  %425 = vmatmul.mubr.bf16.gmra.mrb[0].mxu0 %v292
  %v426 = vpop.f32.mrb[0].mxu0
  %v427 = vadd.f32 %v318, %v426
  %v428 = vpop.f32.mrb[0].mxu0
  %v429 = vpop.f32.mrb[0].mxu0
  %v430 = vadd.f32 %v318, %v429
  %v431 = vpop.f32.mrb[0].mxu0
  %432 = vmatprep.mubr.bf16.mxu0 0
  %433 = vmatmul.mubr.bf16.gmra.mrb[0].mxu0 %v293
  %v434 = vpop.f32.mrb[0].mxu0
  %v435 = vadd.f32 %v318, %v434
  %v436 = vpop.f32.mrb[0].mxu0
  %v437 = vpop.f32.mrb[0].mxu0
  %v438 = vadd.f32 %v318, %v437
  %v439 = vpop.f32.mrb[0].mxu0
  %440 = vmatprep.mubr.bf16.mxu0 0
  %441 = vmatmul.mubr.bf16.gmra.mrb[0].mxu0 %v294
  %v442 = vpop.f32.mrb[0].mxu0
  %v443 = vadd.f32 %v318, %v442
  %v444 = vpop.f32.mrb[0].mxu0
  %v445 = vpop.f32.mrb[0].mxu0
  %v446 = vadd.f32 %v318, %v445
  %v447 = vpop.f32.mrb[0].mxu0
  %448 = vmatprep.mubr.bf16.mxu0 0
  %449 = vmatmul.mubr.bf16.gmra.mrb[0].mxu0 %v295
  %v450 = vpop.f32.mrb[0].mxu0
  %v451 = vadd.f32 %v318, %v450
  %v452 = vpop.f32.mrb[0].mxu0
  %v453 = vpop.f32.mrb[0].mxu0
  %v454 = vadd.f32 %v318, %v453
  %v455 = vpop.f32.mrb[0].mxu0
  %456 = vmatprep.mubr.bf16.mxu0 0
  %457 = vmatmul.mubr.bf16.gmra.mrb[0].mxu0 %v296
  %v458 = vpop.f32.mrb[0].mxu0
  %v459 = vadd.f32 %v318, %v458
  %v460 = vpop.f32.mrb[0].mxu0
  %v461 = vpop.f32.mrb[0].mxu0
  %v462 = vadd.f32 %v318, %v461
  %v463 = vpop.f32.mrb[0].mxu0
  %464 = vdwg.mxu0
  %v465 = vmax.f32 %v403, 0.0
  %v466 = vmax.f32 %v406, 0.0
  %v467 = vmax.f32 %v411, 0.0
  %v468 = vmax.f32 %v414, 0.0
  %v469 = vmax.f32 %v419, 0.0
  %v470 = vmax.f32 %v422, 0.0
  %v471 = vmax.f32 %v427, 0.0
  %v472 = vmax.f32 %v430, 0.0
  %v473 = vmax.f32 %v435, 0.0
  %v474 = vmax.f32 %v438, 0.0
  %v475 = vmax.f32 %v443, 0.0
  %v476 = vmax.f32 %v446, 0.0
  %v477 = vmax.f32 %v451, 0.0
  %v478 = vmax.f32 %v454, 0.0
  %v479 = vmax.f32 %v459, 0.0
  %v480 = vmax.f32 %v462, 0.0
  %v481 = vpack.c.bf16 %v466, %v465
  %v482 = vpack.c.bf16 %v468, %v467
  %v483 = vpack.c.bf16 %v470, %v469
  %v484 = vpack.c.bf16 %v472, %v471
  %v485 = vpack.c.bf16 %v474, %v473
  %v486 = vpack.c.bf16 %v476, %v475
  %v487 = vpack.c.bf16 %v478, %v477
  %v488 = vpack.c.bf16 %v480, %v479
  %v489 = vld [vmem:[%s5] sm:$0xf]
  %v490 = vld [vmem:[%s5 + $0x4] sm:$0xf]
  %v491 = vld [vmem:[%s5 + $0x8] sm:$0xf]
  %v492 = vld [vmem:[%s5 + $0xc] sm:$0xf]
  %v493 = vld [vmem:[%s5 + $0x10] sm:$0xf]
  %v494 = vld [vmem:[%s5 + $0x14] sm:$0xf]
  %v495 = vld [vmem:[%s5 + $0x18] sm:$0xf]
  %v496 = vld [vmem:[%s5 + $0x1c] sm:$0xf]
  %v497 = vld [vmem:[%s5 + $0x20] sm:$0xf]
  %v498 = vld [vmem:[%s5 + $0x24] sm:$0xf]
  %v499 = vld [vmem:[%s5 + $0x28] sm:$0xf]
  %v500 = vld [vmem:[%s5 + $0x2c] sm:$0xf]
  %v501 = vld [vmem:[%s5 + $0x30] sm:$0xf]
  %v502 = vld [vmem:[%s5 + $0x34] sm:$0xf]
  %v503 = vld [vmem:[%s5 + $0x38] sm:$0xf]
  %v504 = vld [vmem:[%s5 + $0x3c] sm:$0xf]
  %v505 = vld [vmem:[%s6] sm:$0x1]
  %v507 = vlaneseq
  %v508 = vshrl.u32 %v507, 7
  %v509 = vsub.s32 0, %v508
  %v510 = vrot.slane %v505, %v509
  %v528 = vunpack.c.l.b16 %v489
  %v529 = vunpack.c.l.b16 %v490
  %v530 = vunpack.c.l.b16 %v491
  %v531 = vunpack.c.l.b16 %v492
  %v532 = vunpack.c.l.b16 %v493
  %v533 = vunpack.c.l.b16 %v494
  %v534 = vunpack.c.l.b16 %v495
  %v535 = vunpack.c.l.b16 %v496
  %v536 = vunpack.c.l.b16 %v497
  %v537 = vunpack.c.l.b16 %v498
  %v538 = vunpack.c.l.b16 %v499
  %v539 = vunpack.c.l.b16 %v500
  %v540 = vunpack.c.l.b16 %v501
  %v541 = vunpack.c.l.b16 %v502
  %v542 = vunpack.c.l.b16 %v503
  %v543 = vunpack.c.l.b16 %v504
  %v544 = vpack.c.b16 %v529, %v528
  %v545 = vpack.c.b16 %v531, %v530
  %v546 = vpack.c.b16 %v533, %v532
  %v547 = vpack.c.b16 %v535, %v534
  %v548 = vpack.c.b16 %v537, %v536
  %v549 = vpack.c.b16 %v539, %v538
  %v550 = vpack.c.b16 %v541, %v540
  %v551 = vpack.c.b16 %v543, %v542
  %560 = vmatprep.subr.bf16.mxu0 0
  %561 = vmatpush1.bf16.msra.mxu0 %v544
  %562 = vmatprep.subr.bf16.mxu0 0
  %563 = vmatpush1.bf16.msra.mxu0 %v545
  %564 = vmatprep.subr.bf16.mxu0 0
  %565 = vmatpush1.bf16.msra.mxu0 %v546
  %566 = vmatprep.subr.bf16.mxu0 0
  %567 = vmatpush1.bf16.msra.mxu0 %v547
  %568 = vmatprep.subr.bf16.mxu0 0
  %569 = vmatpush1.bf16.msra.mxu0 %v548
  %570 = vmatprep.subr.bf16.mxu0 0
  %571 = vmatpush1.bf16.msra.mxu0 %v549
  %572 = vmatprep.subr.bf16.mxu0 0
  %573 = vmatpush1.bf16.msra.mxu0 %v550
  %574 = vmatprep.subr.bf16.mxu0 0
  %575 = vmatpush1.bf16.msra.mxu0 %v551
  %576 = vmatprep.subr.bf16.mxu0 0
  %577 = vmatpush1.bf16.msra.mxu0 0
  %578 = vmatprep.subr.bf16.mxu0 0
  %579 = vmatpush1.bf16.msra.mxu0 0
  %580 = vmatprep.subr.bf16.mxu0 0
  %581 = vmatpush1.bf16.msra.mxu0 0
  %582 = vmatprep.subr.bf16.mxu0 0
  %583 = vmatpush1.bf16.msra.mxu0 0
  %584 = vmatprep.subr.bf16.mxu0 0
  %585 = vmatpush1.bf16.msra.mxu0 0
  %586 = vmatprep.subr.bf16.mxu0 0
  %587 = vmatpush1.bf16.msra.mxu0 0
  %588 = vmatprep.subr.bf16.mxu0 0
  %589 = vmatpush1.bf16.msra.mxu0 0
  %590 = vmatprep.subr.bf16.mxu0 0
  %591 = vmatpush1.bf16.msra.mxu0 0
  %592 = vmatprep.mubr.bf16.mxu0 0
  %593 = vmatmul.mubr.bf16.gmra.mrb[0].mxu0 %v481
  %v594 = vpop.f32.mrb[0].mxu0
  %v595 = vadd.f32 %v510, %v594
  %v596 = vpop.f32.mrb[0].mxu0
  %v597 = vpop.f32.mrb[0].mxu0
  %v598 = vadd.f32 %v510, %v597
  %v599 = vpop.f32.mrb[0].mxu0
  %600 = vmatprep.mubr.bf16.mxu0 0
  %601 = vmatmul.mubr.bf16.gmra.mrb[0].mxu0 %v482
  %v602 = vpop.f32.mrb[0].mxu0
  %v603 = vadd.f32 %v510, %v602
  %v604 = vpop.f32.mrb[0].mxu0
  %v605 = vpop.f32.mrb[0].mxu0
  %v606 = vadd.f32 %v510, %v605
  %v607 = vpop.f32.mrb[0].mxu0
  %608 = vmatprep.mubr.bf16.mxu0 0
  %609 = vmatmul.mubr.bf16.gmra.mrb[0].mxu0 %v483
  %v610 = vpop.f32.mrb[0].mxu0
  %v611 = vadd.f32 %v510, %v610
  %v612 = vpop.f32.mrb[0].mxu0
  %v613 = vpop.f32.mrb[0].mxu0
  %v614 = vadd.f32 %v510, %v613
  %v615 = vpop.f32.mrb[0].mxu0
  %616 = vmatprep.mubr.bf16.mxu0 0
  %617 = vmatmul.mubr.bf16.gmra.mrb[0].mxu0 %v484
  %v618 = vpop.f32.mrb[0].mxu0
  %v619 = vadd.f32 %v510, %v618
  %v620 = vpop.f32.mrb[0].mxu0
  %v621 = vpop.f32.mrb[0].mxu0
  %v622 = vadd.f32 %v510, %v621
  %v623 = vpop.f32.mrb[0].mxu0
  %624 = vmatprep.mubr.bf16.mxu0 0
  %625 = vmatmul.mubr.bf16.gmra.mrb[0].mxu0 %v485
  %v626 = vpop.f32.mrb[0].mxu0
  %v627 = vadd.f32 %v510, %v626
  %v628 = vpop.f32.mrb[0].mxu0
  %v629 = vpop.f32.mrb[0].mxu0
  %v630 = vadd.f32 %v510, %v629
  %v631 = vpop.f32.mrb[0].mxu0
  %632 = vmatprep.mubr.bf16.mxu0 0
  %633 = vmatmul.mubr.bf16.gmra.mrb[0].mxu0 %v486
  %v634 = vpop.f32.mrb[0].mxu0
  %v635 = vadd.f32 %v510, %v634
  %v636 = vpop.f32.mrb[0].mxu0
  %v637 = vpop.f32.mrb[0].mxu0
  %v638 = vadd.f32 %v510, %v637
  %v639 = vpop.f32.mrb[0].mxu0
  %640 = vmatprep.mubr.bf16.mxu0 0
  %641 = vmatmul.mubr.bf16.gmra.mrb[0].mxu0 %v487
  %v642 = vpop.f32.mrb[0].mxu0
  %v643 = vadd.f32 %v510, %v642
  %v644 = vpop.f32.mrb[0].mxu0
  %v645 = vpop.f32.mrb[0].mxu0
  %v646 = vadd.f32 %v510, %v645
  %v647 = vpop.f32.mrb[0].mxu0
  %648 = vmatprep.mubr.bf16.mxu0 0
  %649 = vmatmul.mubr.bf16.gmra.mrb[0].mxu0 %v488
  %v650 = vpop.f32.mrb[0].mxu0
  %v651 = vadd.f32 %v510, %v650
  %v652 = vpop.f32.mrb[0].mxu0
  %v653 = vpop.f32.mrb[0].mxu0
  %v654 = vadd.f32 %v510, %v653
  %v655 = vpop.f32.mrb[0].mxu0
  %656 = vdwg.mxu0
  %v657 = vmax.f32 %v595, 0.0
  %v658 = vmax.f32 %v598, 0.0
  %v659 = vmax.f32 %v603, 0.0
  %v660 = vmax.f32 %v606, 0.0
  %v661 = vmax.f32 %v611, 0.0
  %v662 = vmax.f32 %v614, 0.0
  %v663 = vmax.f32 %v619, 0.0
  %v664 = vmax.f32 %v622, 0.0
  %v665 = vmax.f32 %v627, 0.0
  %v666 = vmax.f32 %v630, 0.0
  %v667 = vmax.f32 %v635, 0.0
  %v668 = vmax.f32 %v638, 0.0
  %v669 = vmax.f32 %v643, 0.0
  %v670 = vmax.f32 %v646, 0.0
  %v671 = vmax.f32 %v651, 0.0
  %v672 = vmax.f32 %v654, 0.0
  %v673 = vpack.c.bf16 %v658, %v657
  %v674 = vpack.c.bf16 %v660, %v659
  %v675 = vpack.c.bf16 %v662, %v661
  %v676 = vpack.c.bf16 %v664, %v663
  %v677 = vpack.c.bf16 %v666, %v665
  %v678 = vpack.c.bf16 %v668, %v667
  %v679 = vpack.c.bf16 %v670, %v669
  %v680 = vpack.c.bf16 %v672, %v671
  %s681 = scalar_lea.vmem %s2, 64
  %v682 = vld [vmem:[%s681] sm:$0xf]
  %v683 = vld [vmem:[%s681 + $0x4] sm:$0xf]
  %v684 = vld [vmem:[%s681 + $0x8] sm:$0xf]
  %v685 = vld [vmem:[%s681 + $0xc] sm:$0xf]
  %v686 = vld [vmem:[%s681 + $0x10] sm:$0xf]
  %v687 = vld [vmem:[%s681 + $0x14] sm:$0xf]
  %v688 = vld [vmem:[%s681 + $0x18] sm:$0xf]
  %v689 = vld [vmem:[%s681 + $0x1c] sm:$0xf]
  %v690 = vld [vmem:[%s681 + $0x20] sm:$0xf]
  %v691 = vld [vmem:[%s681 + $0x24] sm:$0xf]
  %v692 = vld [vmem:[%s681 + $0x28] sm:$0xf]
  %v693 = vld [vmem:[%s681 + $0x2c] sm:$0xf]
  %v694 = vld [vmem:[%s681 + $0x30] sm:$0xf]
  %v695 = vld [vmem:[%s681 + $0x34] sm:$0xf]
  %v696 = vld [vmem:[%s681 + $0x38] sm:$0xf]
  %v697 = vld [vmem:[%s681 + $0x3c] sm:$0xf]
  %v698 = vunpack.c.l.bf16 %v682
  %v699 = vunpack.c.l.bf16 %v683
  %v700 = vunpack.c.l.bf16 %v684
  %v701 = vunpack.c.l.bf16 %v685
  %v702 = vunpack.c.l.bf16 %v686
  %v703 = vunpack.c.l.bf16 %v687
  %v704 = vunpack.c.l.bf16 %v688
  %v705 = vunpack.c.l.bf16 %v689
  %v706 = vunpack.c.l.bf16 %v690
  %v707 = vunpack.c.l.bf16 %v691
  %v708 = vunpack.c.l.bf16 %v692
  %v709 = vunpack.c.l.bf16 %v693
  %v710 = vunpack.c.l.bf16 %v694
  %v711 = vunpack.c.l.bf16 %v695
  %v712 = vunpack.c.l.bf16 %v696
  %v713 = vunpack.c.l.bf16 %v697
  %714 = vmatprep.subr.bf16.mxu0 0
  %715 = vmatpush1.bf16.msra.mxu0 %v673
  %716 = vmatprep.subr.bf16.mxu0 0
  %717 = vmatpush1.bf16.msra.mxu0 %v674
  %718 = vmatprep.subr.bf16.mxu0 0
  %719 = vmatpush1.bf16.msra.mxu0 %v675
  %720 = vmatprep.subr.bf16.mxu0 0
  %721 = vmatpush1.bf16.msra.mxu0 %v676
  %722 = vmatprep.subr.bf16.mxu0 0
  %723 = vmatpush1.bf16.msra.mxu0 %v677
  %724 = vmatprep.subr.bf16.mxu0 0
  %725 = vmatpush1.bf16.msra.mxu0 %v678
  %726 = vmatprep.subr.bf16.mxu0 0
  %727 = vmatpush1.bf16.msra.mxu0 %v679
  %728 = vmatprep.subr.bf16.mxu0 0
  %729 = vmatpush1.bf16.msra.mxu0 %v680
  %730 = vmatprep.subr.bf16.mxu0 0
  %731 = vmatpush1.bf16.msra.mxu0 0
  %732 = vmatprep.subr.bf16.mxu0 0
  %733 = vmatpush1.bf16.msra.mxu0 0
  %734 = vmatprep.subr.bf16.mxu0 0
  %735 = vmatpush1.bf16.msra.mxu0 0
  %736 = vmatprep.subr.bf16.mxu0 0
  %737 = vmatpush1.bf16.msra.mxu0 0
  %738 = vmatprep.subr.bf16.mxu0 0
  %739 = vmatpush1.bf16.msra.mxu0 0
  %740 = vmatprep.subr.bf16.mxu0 0
  %741 = vmatpush1.bf16.msra.mxu0 0
  %742 = vmatprep.subr.bf16.mxu0 0
  %743 = vmatpush1.bf16.msra.mxu0 0
  %744 = vmatprep.subr.bf16.mxu0 0
  %745 = vmatpush1.bf16.msra.mxu0 0
  %746 = vmatprep.mubr.bf16.mxu0 0
  %747 = vmatmul.mubr.bf16.gmra.mrb[0].mxu0 %v128
  %v748 = vpop.f32.mrb[0].mxu0
  %v749 = vadd.f32 %v698, %v748
  %v750 = vpop.f32.mrb[0].mxu0
  %v751 = vpop.f32.mrb[0].mxu0
  %v752 = vadd.f32 %v699, %v751
  %v753 = vpop.f32.mrb[0].mxu0
  %754 = vmatprep.mubr.bf16.mxu0 0
  %755 = vmatmul.mubr.bf16.gmra.mrb[0].mxu0 %v129
  %v756 = vpop.f32.mrb[0].mxu0
  %v757 = vadd.f32 %v700, %v756
  %v758 = vpop.f32.mrb[0].mxu0
  %v759 = vpop.f32.mrb[0].mxu0
  %v760 = vadd.f32 %v701, %v759
  %v761 = vpop.f32.mrb[0].mxu0
  %762 = vmatprep.mubr.bf16.mxu0 0
  %763 = vmatmul.mubr.bf16.gmra.mrb[0].mxu0 %v130
  %v764 = vpop.f32.mrb[0].mxu0
  %v765 = vadd.f32 %v702, %v764
  %v766 = vpop.f32.mrb[0].mxu0
  %v767 = vpop.f32.mrb[0].mxu0
  %v768 = vadd.f32 %v703, %v767
  %v769 = vpop.f32.mrb[0].mxu0
  %770 = vmatprep.mubr.bf16.mxu0 0
  %771 = vmatmul.mubr.bf16.gmra.mrb[0].mxu0 %v131
  %v772 = vpop.f32.mrb[0].mxu0
  %v773 = vadd.f32 %v704, %v772
  %v774 = vpop.f32.mrb[0].mxu0
  %v775 = vpop.f32.mrb[0].mxu0
  %v776 = vadd.f32 %v705, %v775
  %v777 = vpop.f32.mrb[0].mxu0
  %778 = vmatprep.mubr.bf16.mxu0 0
  %779 = vmatmul.mubr.bf16.gmra.mrb[0].mxu0 %v132
  %v780 = vpop.f32.mrb[0].mxu0
  %v781 = vadd.f32 %v706, %v780
  %v782 = vpop.f32.mrb[0].mxu0
  %v783 = vpop.f32.mrb[0].mxu0
  %v784 = vadd.f32 %v707, %v783
  %v785 = vpop.f32.mrb[0].mxu0
  %786 = vmatprep.mubr.bf16.mxu0 0
  %787 = vmatmul.mubr.bf16.gmra.mrb[0].mxu0 %v133
  %v788 = vpop.f32.mrb[0].mxu0
  %v789 = vadd.f32 %v708, %v788
  %v790 = vpop.f32.mrb[0].mxu0
  %v791 = vpop.f32.mrb[0].mxu0
  %v792 = vadd.f32 %v709, %v791
  %v793 = vpop.f32.mrb[0].mxu0
  %794 = vmatprep.mubr.bf16.mxu0 0
  %795 = vmatmul.mubr.bf16.gmra.mrb[0].mxu0 %v134
  %v796 = vpop.f32.mrb[0].mxu0
  %v797 = vadd.f32 %v710, %v796
  %v798 = vpop.f32.mrb[0].mxu0
  %v799 = vpop.f32.mrb[0].mxu0
  %v800 = vadd.f32 %v711, %v799
  %v801 = vpop.f32.mrb[0].mxu0
  %802 = vmatprep.mubr.bf16.mxu0 0
  %803 = vmatmul.mubr.bf16.gmra.mrb[0].mxu0 %v135
  %v804 = vpop.f32.mrb[0].mxu0
  %v805 = vadd.f32 %v712, %v804
  %v806 = vpop.f32.mrb[0].mxu0
  %v807 = vpop.f32.mrb[0].mxu0
  %v808 = vadd.f32 %v713, %v807
  %v809 = vpop.f32.mrb[0].mxu0
  %810 = vdwg.mxu0
  %v811 = vpack.c.bf16 %v752, %v749
  %v812 = vpack.c.bf16 %v760, %v757
  %v813 = vpack.c.bf16 %v768, %v765
  %v814 = vpack.c.bf16 %v776, %v773
  %v815 = vpack.c.bf16 %v784, %v781
  %v816 = vpack.c.bf16 %v792, %v789
  %v817 = vpack.c.bf16 %v800, %v797
  %v818 = vpack.c.bf16 %v808, %v805
  %s819 = scalar_lea.vmem %s3, 64
  %v820 = vld [vmem:[%s819] sm:$0xf]
  %v821 = vld [vmem:[%s819 + $0x4] sm:$0xf]
  %v822 = vld [vmem:[%s819 + $0x8] sm:$0xf]
  %v823 = vld [vmem:[%s819 + $0xc] sm:$0xf]
  %v824 = vld [vmem:[%s819 + $0x10] sm:$0xf]
  %v825 = vld [vmem:[%s819 + $0x14] sm:$0xf]
  %v826 = vld [vmem:[%s819 + $0x18] sm:$0xf]
  %v827 = vld [vmem:[%s819 + $0x1c] sm:$0xf]
  %v828 = vld [vmem:[%s819 + $0x20] sm:$0xf]
  %v829 = vld [vmem:[%s819 + $0x24] sm:$0xf]
  %v830 = vld [vmem:[%s819 + $0x28] sm:$0xf]
  %v831 = vld [vmem:[%s819 + $0x2c] sm:$0xf]
  %v832 = vld [vmem:[%s819 + $0x30] sm:$0xf]
  %v833 = vld [vmem:[%s819 + $0x34] sm:$0xf]
  %v834 = vld [vmem:[%s819 + $0x38] sm:$0xf]
  %v835 = vld [vmem:[%s819 + $0x3c] sm:$0xf]
  %s836 = scalar_lea.vmem %s4, 1
  %v837 = vld [vmem:[%s836] sm:$0x1]
  %v839 = vlaneseq
  %v840 = vshrl.u32 %v839, 7
  %v841 = vsub.s32 0, %v840
  %v842 = vrot.slane %v837, %v841
  %v860 = vunpack.c.l.b16 %v820
  %v861 = vunpack.c.l.b16 %v821
  %v862 = vunpack.c.l.b16 %v822
  %v863 = vunpack.c.l.b16 %v823
  %v864 = vunpack.c.l.b16 %v824
  %v865 = vunpack.c.l.b16 %v825
  %v866 = vunpack.c.l.b16 %v826
  %v867 = vunpack.c.l.b16 %v827
  %v868 = vunpack.c.l.b16 %v828
  %v869 = vunpack.c.l.b16 %v829
  %v870 = vunpack.c.l.b16 %v830
  %v871 = vunpack.c.l.b16 %v831
  %v872 = vunpack.c.l.b16 %v832
  %v873 = vunpack.c.l.b16 %v833
  %v874 = vunpack.c.l.b16 %v834
  %v875 = vunpack.c.l.b16 %v835
  %v876 = vpack.c.b16 %v861, %v860
  %v877 = vpack.c.b16 %v863, %v862
  %v878 = vpack.c.b16 %v865, %v864
  %v879 = vpack.c.b16 %v867, %v866
  %v880 = vpack.c.b16 %v869, %v868
  %v881 = vpack.c.b16 %v871, %v870
  %v882 = vpack.c.b16 %v873, %v872
  %v883 = vpack.c.b16 %v875, %v874
  %892 = vmatprep.subr.bf16.mxu0 0
  %893 = vmatpush1.bf16.msra.mxu0 %v876
  %894 = vmatprep.subr.bf16.mxu0 0
  %895 = vmatpush1.bf16.msra.mxu0 %v877
  %896 = vmatprep.subr.bf16.mxu0 0
  %897 = vmatpush1.bf16.msra.mxu0 %v878
  %898 = vmatprep.subr.bf16.mxu0 0
  %899 = vmatpush1.bf16.msra.mxu0 %v879
  %900 = vmatprep.subr.bf16.mxu0 0
  %901 = vmatpush1.bf16.msra.mxu0 %v880
  %902 = vmatprep.subr.bf16.mxu0 0
  %903 = vmatpush1.bf16.msra.mxu0 %v881
  %904 = vmatprep.subr.bf16.mxu0 0
  %905 = vmatpush1.bf16.msra.mxu0 %v882
  %906 = vmatprep.subr.bf16.mxu0 0
  %907 = vmatpush1.bf16.msra.mxu0 %v883
  %908 = vmatprep.subr.bf16.mxu0 0
  %909 = vmatpush1.bf16.msra.mxu0 0
  %910 = vmatprep.subr.bf16.mxu0 0
  %911 = vmatpush1.bf16.msra.mxu0 0
  %912 = vmatprep.subr.bf16.mxu0 0
  %913 = vmatpush1.bf16.msra.mxu0 0
  %914 = vmatprep.subr.bf16.mxu0 0
  %915 = vmatpush1.bf16.msra.mxu0 0
  %916 = vmatprep.subr.bf16.mxu0 0
  %917 = vmatpush1.bf16.msra.mxu0 0
  %918 = vmatprep.subr.bf16.mxu0 0
  %919 = vmatpush1.bf16.msra.mxu0 0
  %920 = vmatprep.subr.bf16.mxu0 0
  %921 = vmatpush1.bf16.msra.mxu0 0
  %922 = vmatprep.subr.bf16.mxu0 0
  %923 = vmatpush1.bf16.msra.mxu0 0
  %924 = vmatprep.mubr.bf16.mxu0 0
  %925 = vmatmul.mubr.bf16.gmra.mrb[0].mxu0 %v811
  %v926 = vpop.f32.mrb[0].mxu0
  %v927 = vadd.f32 %v842, %v926
  %v928 = vpop.f32.mrb[0].mxu0
  %v929 = vpop.f32.mrb[0].mxu0
  %v930 = vadd.f32 %v842, %v929
  %v931 = vpop.f32.mrb[0].mxu0
  %932 = vmatprep.mubr.bf16.mxu0 0
  %933 = vmatmul.mubr.bf16.gmra.mrb[0].mxu0 %v812
  %v934 = vpop.f32.mrb[0].mxu0
  %v935 = vadd.f32 %v842, %v934
  %v936 = vpop.f32.mrb[0].mxu0
  %v937 = vpop.f32.mrb[0].mxu0
  %v938 = vadd.f32 %v842, %v937
  %v939 = vpop.f32.mrb[0].mxu0
  %940 = vmatprep.mubr.bf16.mxu0 0
  %941 = vmatmul.mubr.bf16.gmra.mrb[0].mxu0 %v813
  %v942 = vpop.f32.mrb[0].mxu0
  %v943 = vadd.f32 %v842, %v942
  %v944 = vpop.f32.mrb[0].mxu0
  %v945 = vpop.f32.mrb[0].mxu0
  %v946 = vadd.f32 %v842, %v945
  %v947 = vpop.f32.mrb[0].mxu0
  %948 = vmatprep.mubr.bf16.mxu0 0
  %949 = vmatmul.mubr.bf16.gmra.mrb[0].mxu0 %v814
  %v950 = vpop.f32.mrb[0].mxu0
  %v951 = vadd.f32 %v842, %v950
  %v952 = vpop.f32.mrb[0].mxu0
  %v953 = vpop.f32.mrb[0].mxu0
  %v954 = vadd.f32 %v842, %v953
  %v955 = vpop.f32.mrb[0].mxu0
  %956 = vmatprep.mubr.bf16.mxu0 0
  %957 = vmatmul.mubr.bf16.gmra.mrb[0].mxu0 %v815
  %v958 = vpop.f32.mrb[0].mxu0
  %v959 = vadd.f32 %v842, %v958
  %v960 = vpop.f32.mrb[0].mxu0
  %v961 = vpop.f32.mrb[0].mxu0
  %v962 = vadd.f32 %v842, %v961
  %v963 = vpop.f32.mrb[0].mxu0
  %964 = vmatprep.mubr.bf16.mxu0 0
  %965 = vmatmul.mubr.bf16.gmra.mrb[0].mxu0 %v816
  %v966 = vpop.f32.mrb[0].mxu0
  %v967 = vadd.f32 %v842, %v966
  %v968 = vpop.f32.mrb[0].mxu0
  %v969 = vpop.f32.mrb[0].mxu0
  %v970 = vadd.f32 %v842, %v969
  %v971 = vpop.f32.mrb[0].mxu0
  %972 = vmatprep.mubr.bf16.mxu0 0
  %973 = vmatmul.mubr.bf16.gmra.mrb[0].mxu0 %v817
  %v974 = vpop.f32.mrb[0].mxu0
  %v975 = vadd.f32 %v842, %v974
  %v976 = vpop.f32.mrb[0].mxu0
  %v977 = vpop.f32.mrb[0].mxu0
  %v978 = vadd.f32 %v842, %v977
  %v979 = vpop.f32.mrb[0].mxu0
  %980 = vmatprep.mubr.bf16.mxu0 0
  %981 = vmatmul.mubr.bf16.gmra.mrb[0].mxu0 %v818
  %v982 = vpop.f32.mrb[0].mxu0
  %v983 = vadd.f32 %v842, %v982
  %v984 = vpop.f32.mrb[0].mxu0
  %v985 = vpop.f32.mrb[0].mxu0
  %v986 = vadd.f32 %v842, %v985
  %v987 = vpop.f32.mrb[0].mxu0
  %988 = vdwg.mxu0
  %v989 = vmax.f32 %v927, 0.0
  %v990 = vmax.f32 %v930, 0.0
  %v991 = vmax.f32 %v935, 0.0
  %v992 = vmax.f32 %v938, 0.0
  %v993 = vmax.f32 %v943, 0.0
  %v994 = vmax.f32 %v946, 0.0
  %v995 = vmax.f32 %v951, 0.0
  %v996 = vmax.f32 %v954, 0.0
  %v997 = vmax.f32 %v959, 0.0
  %v998 = vmax.f32 %v962, 0.0
  %v999 = vmax.f32 %v967, 0.0
  %v1000 = vmax.f32 %v970, 0.0
  %v1001 = vmax.f32 %v975, 0.0
  %v1002 = vmax.f32 %v978, 0.0
  %v1003 = vmax.f32 %v983, 0.0
  %v1004 = vmax.f32 %v986, 0.0
  %v1005 = vpack.c.bf16 %v990, %v989
  %v1006 = vpack.c.bf16 %v992, %v991
  %v1007 = vpack.c.bf16 %v994, %v993
  %v1008 = vpack.c.bf16 %v996, %v995
  %v1009 = vpack.c.bf16 %v998, %v997
  %v1010 = vpack.c.bf16 %v1000, %v999
  %v1011 = vpack.c.bf16 %v1002, %v1001
  %v1012 = vpack.c.bf16 %v1004, %v1003
  %s1013 = scalar_lea.vmem %s5, 64
  %v1014 = vld [vmem:[%s1013] sm:$0xf]
  %v1015 = vld [vmem:[%s1013 + $0x4] sm:$0xf]
  %v1016 = vld [vmem:[%s1013 + $0x8] sm:$0xf]
  %v1017 = vld [vmem:[%s1013 + $0xc] sm:$0xf]
  %v1018 = vld [vmem:[%s1013 + $0x10] sm:$0xf]
  %v1019 = vld [vmem:[%s1013 + $0x14] sm:$0xf]
  %v1020 = vld [vmem:[%s1013 + $0x18] sm:$0xf]
  %v1021 = vld [vmem:[%s1013 + $0x1c] sm:$0xf]
  %v1022 = vld [vmem:[%s1013 + $0x20] sm:$0xf]
  %v1023 = vld [vmem:[%s1013 + $0x24] sm:$0xf]
  %v1024 = vld [vmem:[%s1013 + $0x28] sm:$0xf]
  %v1025 = vld [vmem:[%s1013 + $0x2c] sm:$0xf]
  %v1026 = vld [vmem:[%s1013 + $0x30] sm:$0xf]
  %v1027 = vld [vmem:[%s1013 + $0x34] sm:$0xf]
  %v1028 = vld [vmem:[%s1013 + $0x38] sm:$0xf]
  %v1029 = vld [vmem:[%s1013 + $0x3c] sm:$0xf]
  %s1030 = scalar_lea.vmem %s6, 1
  %v1031 = vld [vmem:[%s1030] sm:$0x1]
  %v1033 = vlaneseq
  %v1034 = vshrl.u32 %v1033, 7
  %v1035 = vsub.s32 0, %v1034
  %v1036 = vrot.slane %v1031, %v1035
  %v1054 = vunpack.c.l.b16 %v1014
  %v1055 = vunpack.c.l.b16 %v1015
  %v1056 = vunpack.c.l.b16 %v1016
  %v1057 = vunpack.c.l.b16 %v1017
  %v1058 = vunpack.c.l.b16 %v1018
  %v1059 = vunpack.c.l.b16 %v1019
  %v1060 = vunpack.c.l.b16 %v1020
  %v1061 = vunpack.c.l.b16 %v1021
  %v1062 = vunpack.c.l.b16 %v1022
  %v1063 = vunpack.c.l.b16 %v1023
  %v1064 = vunpack.c.l.b16 %v1024
  %v1065 = vunpack.c.l.b16 %v1025
  %v1066 = vunpack.c.l.b16 %v1026
  %v1067 = vunpack.c.l.b16 %v1027
  %v1068 = vunpack.c.l.b16 %v1028
  %v1069 = vunpack.c.l.b16 %v1029
  %v1070 = vpack.c.b16 %v1055, %v1054
  %v1071 = vpack.c.b16 %v1057, %v1056
  %v1072 = vpack.c.b16 %v1059, %v1058
  %v1073 = vpack.c.b16 %v1061, %v1060
  %v1074 = vpack.c.b16 %v1063, %v1062
  %v1075 = vpack.c.b16 %v1065, %v1064
  %v1076 = vpack.c.b16 %v1067, %v1066
  %v1077 = vpack.c.b16 %v1069, %v1068
  %1086 = vmatprep.subr.bf16.mxu0 0
  %1087 = vmatpush1.bf16.msra.mxu0 %v1070
  %1088 = vmatprep.subr.bf16.mxu0 0
  %1089 = vmatpush1.bf16.msra.mxu0 %v1071
  %1090 = vmatprep.subr.bf16.mxu0 0
  %1091 = vmatpush1.bf16.msra.mxu0 %v1072
  %1092 = vmatprep.subr.bf16.mxu0 0
  %1093 = vmatpush1.bf16.msra.mxu0 %v1073
  %1094 = vmatprep.subr.bf16.mxu0 0
  %1095 = vmatpush1.bf16.msra.mxu0 %v1074
  %1096 = vmatprep.subr.bf16.mxu0 0
  %1097 = vmatpush1.bf16.msra.mxu0 %v1075
  %1098 = vmatprep.subr.bf16.mxu0 0
  %1099 = vmatpush1.bf16.msra.mxu0 %v1076
  %1100 = vmatprep.subr.bf16.mxu0 0
  %1101 = vmatpush1.bf16.msra.mxu0 %v1077
  %1102 = vmatprep.subr.bf16.mxu0 0
  %1103 = vmatpush1.bf16.msra.mxu0 0
  %1104 = vmatprep.subr.bf16.mxu0 0
  %1105 = vmatpush1.bf16.msra.mxu0 0
  %1106 = vmatprep.subr.bf16.mxu0 0
  %1107 = vmatpush1.bf16.msra.mxu0 0
  %1108 = vmatprep.subr.bf16.mxu0 0
  %1109 = vmatpush1.bf16.msra.mxu0 0
  %1110 = vmatprep.subr.bf16.mxu0 0
  %1111 = vmatpush1.bf16.msra.mxu0 0
  %1112 = vmatprep.subr.bf16.mxu0 0
  %1113 = vmatpush1.bf16.msra.mxu0 0
  %1114 = vmatprep.subr.bf16.mxu0 0
  %1115 = vmatpush1.bf16.msra.mxu0 0
  %1116 = vmatprep.subr.bf16.mxu0 0
  %1117 = vmatpush1.bf16.msra.mxu0 0
  %1118 = vmatprep.mubr.bf16.mxu0 0
  %1119 = vmatmul.mubr.bf16.gmra.mrb[0].mxu0 %v1005
  %v1120 = vpop.f32.mrb[0].mxu0
  %v1121 = vadd.f32 %v1036, %v1120
  %v1122 = vpop.f32.mrb[0].mxu0
  %v1123 = vpop.f32.mrb[0].mxu0
  %v1124 = vadd.f32 %v1036, %v1123
  %v1125 = vpop.f32.mrb[0].mxu0
  %1126 = vmatprep.mubr.bf16.mxu0 0
  %1127 = vmatmul.mubr.bf16.gmra.mrb[0].mxu0 %v1006
  %v1128 = vpop.f32.mrb[0].mxu0
  %v1129 = vadd.f32 %v1036, %v1128
  %v1130 = vpop.f32.mrb[0].mxu0
  %v1131 = vpop.f32.mrb[0].mxu0
  %v1132 = vadd.f32 %v1036, %v1131
  %v1133 = vpop.f32.mrb[0].mxu0
  %1134 = vmatprep.mubr.bf16.mxu0 0
  %1135 = vmatmul.mubr.bf16.gmra.mrb[0].mxu0 %v1007
  %v1136 = vpop.f32.mrb[0].mxu0
  %v1137 = vadd.f32 %v1036, %v1136
  %v1138 = vpop.f32.mrb[0].mxu0
  %v1139 = vpop.f32.mrb[0].mxu0
  %v1140 = vadd.f32 %v1036, %v1139
  %v1141 = vpop.f32.mrb[0].mxu0
  %1142 = vmatprep.mubr.bf16.mxu0 0
  %1143 = vmatmul.mubr.bf16.gmra.mrb[0].mxu0 %v1008
  %v1144 = vpop.f32.mrb[0].mxu0
  %v1145 = vadd.f32 %v1036, %v1144
  %v1146 = vpop.f32.mrb[0].mxu0
  %v1147 = vpop.f32.mrb[0].mxu0
  %v1148 = vadd.f32 %v1036, %v1147
  %v1149 = vpop.f32.mrb[0].mxu0
  %1150 = vmatprep.mubr.bf16.mxu0 0
  %1151 = vmatmul.mubr.bf16.gmra.mrb[0].mxu0 %v1009
  %v1152 = vpop.f32.mrb[0].mxu0
  %v1153 = vadd.f32 %v1036, %v1152
  %v1154 = vpop.f32.mrb[0].mxu0
  %v1155 = vpop.f32.mrb[0].mxu0
  %v1156 = vadd.f32 %v1036, %v1155
  %v1157 = vpop.f32.mrb[0].mxu0
  %1158 = vmatprep.mubr.bf16.mxu0 0
  %1159 = vmatmul.mubr.bf16.gmra.mrb[0].mxu0 %v1010
  %v1160 = vpop.f32.mrb[0].mxu0
  %v1161 = vadd.f32 %v1036, %v1160
  %v1162 = vpop.f32.mrb[0].mxu0
  %v1163 = vpop.f32.mrb[0].mxu0
  %v1164 = vadd.f32 %v1036, %v1163
  %v1165 = vpop.f32.mrb[0].mxu0
  %1166 = vmatprep.mubr.bf16.mxu0 0
  %1167 = vmatmul.mubr.bf16.gmra.mrb[0].mxu0 %v1011
  %v1168 = vpop.f32.mrb[0].mxu0
  %v1169 = vadd.f32 %v1036, %v1168
  %v1170 = vpop.f32.mrb[0].mxu0
  %v1171 = vpop.f32.mrb[0].mxu0
  %v1172 = vadd.f32 %v1036, %v1171
  %v1173 = vpop.f32.mrb[0].mxu0
  %1174 = vmatprep.mubr.bf16.mxu0 0
  %1175 = vmatmul.mubr.bf16.gmra.mrb[0].mxu0 %v1012
  %v1176 = vpop.f32.mrb[0].mxu0
  %v1177 = vadd.f32 %v1036, %v1176
  %v1178 = vpop.f32.mrb[0].mxu0
  %v1179 = vpop.f32.mrb[0].mxu0
  %v1180 = vadd.f32 %v1036, %v1179
  %v1181 = vpop.f32.mrb[0].mxu0
  %1182 = vdwg.mxu0
  %v1183 = vmax.f32 %v1121, 0.0
  %v1184 = vmax.f32 %v1124, 0.0
  %v1185 = vmax.f32 %v1129, 0.0
  %v1186 = vmax.f32 %v1132, 0.0
  %v1187 = vmax.f32 %v1137, 0.0
  %v1188 = vmax.f32 %v1140, 0.0
  %v1189 = vmax.f32 %v1145, 0.0
  %v1190 = vmax.f32 %v1148, 0.0
  %v1191 = vmax.f32 %v1153, 0.0
  %v1192 = vmax.f32 %v1156, 0.0
  %v1193 = vmax.f32 %v1161, 0.0
  %v1194 = vmax.f32 %v1164, 0.0
  %v1195 = vmax.f32 %v1169, 0.0
  %v1196 = vmax.f32 %v1172, 0.0
  %v1197 = vmax.f32 %v1177, 0.0
  %v1198 = vmax.f32 %v1180, 0.0
  %v1199 = vpack.c.bf16 %v1184, %v1183
  %v1200 = vpack.c.bf16 %v1186, %v1185
  %v1201 = vpack.c.bf16 %v1188, %v1187
  %v1202 = vpack.c.bf16 %v1190, %v1189
  %v1203 = vpack.c.bf16 %v1192, %v1191
  %v1204 = vpack.c.bf16 %v1194, %v1193
  %v1205 = vpack.c.bf16 %v1196, %v1195
  %v1206 = vpack.c.bf16 %v1198, %v1197
  %s1207 = scalar_lea.vmem %s2, 128
  %v1208 = vld [vmem:[%s1207] sm:$0xf]
  %v1209 = vld [vmem:[%s1207 + $0x4] sm:$0xf]
  %v1210 = vld [vmem:[%s1207 + $0x8] sm:$0xf]
  %v1211 = vld [vmem:[%s1207 + $0xc] sm:$0xf]
  %v1212 = vld [vmem:[%s1207 + $0x10] sm:$0xf]
  %v1213 = vld [vmem:[%s1207 + $0x14] sm:$0xf]
  %v1214 = vld [vmem:[%s1207 + $0x18] sm:$0xf]
  %v1215 = vld [vmem:[%s1207 + $0x1c] sm:$0xf]
  %v1216 = vld [vmem:[%s1207 + $0x20] sm:$0xf]
  %v1217 = vld [vmem:[%s1207 + $0x24] sm:$0xf]
  %v1218 = vld [vmem:[%s1207 + $0x28] sm:$0xf]
  %v1219 = vld [vmem:[%s1207 + $0x2c] sm:$0xf]
  %v1220 = vld [vmem:[%s1207 + $0x30] sm:$0xf]
  %v1221 = vld [vmem:[%s1207 + $0x34] sm:$0xf]
  %v1222 = vld [vmem:[%s1207 + $0x38] sm:$0xf]
  %v1223 = vld [vmem:[%s1207 + $0x3c] sm:$0xf]
  %v1224 = vunpack.c.l.bf16 %v1208
  %v1225 = vunpack.c.l.bf16 %v1209
  %v1226 = vunpack.c.l.bf16 %v1210
  %v1227 = vunpack.c.l.bf16 %v1211
  %v1228 = vunpack.c.l.bf16 %v1212
  %v1229 = vunpack.c.l.bf16 %v1213
  %v1230 = vunpack.c.l.bf16 %v1214
  %v1231 = vunpack.c.l.bf16 %v1215
  %v1232 = vunpack.c.l.bf16 %v1216
  %v1233 = vunpack.c.l.bf16 %v1217
  %v1234 = vunpack.c.l.bf16 %v1218
  %v1235 = vunpack.c.l.bf16 %v1219
  %v1236 = vunpack.c.l.bf16 %v1220
  %v1237 = vunpack.c.l.bf16 %v1221
  %v1238 = vunpack.c.l.bf16 %v1222
  %v1239 = vunpack.c.l.bf16 %v1223
  %1240 = vmatprep.subr.bf16.mxu0 0
  %1241 = vmatpush1.bf16.msra.mxu0 %v1199
  %1242 = vmatprep.subr.bf16.mxu0 0
  %1243 = vmatpush1.bf16.msra.mxu0 %v1200
  %1244 = vmatprep.subr.bf16.mxu0 0
  %1245 = vmatpush1.bf16.msra.mxu0 %v1201
  %1246 = vmatprep.subr.bf16.mxu0 0
  %1247 = vmatpush1.bf16.msra.mxu0 %v1202
  %1248 = vmatprep.subr.bf16.mxu0 0
  %1249 = vmatpush1.bf16.msra.mxu0 %v1203
  %1250 = vmatprep.subr.bf16.mxu0 0
  %1251 = vmatpush1.bf16.msra.mxu0 %v1204
  %1252 = vmatprep.subr.bf16.mxu0 0
  %1253 = vmatpush1.bf16.msra.mxu0 %v1205
  %1254 = vmatprep.subr.bf16.mxu0 0
  %1255 = vmatpush1.bf16.msra.mxu0 %v1206
  %1256 = vmatprep.subr.bf16.mxu0 0
  %1257 = vmatpush1.bf16.msra.mxu0 0
  %1258 = vmatprep.subr.bf16.mxu0 0
  %1259 = vmatpush1.bf16.msra.mxu0 0
  %1260 = vmatprep.subr.bf16.mxu0 0
  %1261 = vmatpush1.bf16.msra.mxu0 0
  %1262 = vmatprep.subr.bf16.mxu0 0
  %1263 = vmatpush1.bf16.msra.mxu0 0
  %1264 = vmatprep.subr.bf16.mxu0 0
  %1265 = vmatpush1.bf16.msra.mxu0 0
  %1266 = vmatprep.subr.bf16.mxu0 0
  %1267 = vmatpush1.bf16.msra.mxu0 0
  %1268 = vmatprep.subr.bf16.mxu0 0
  %1269 = vmatpush1.bf16.msra.mxu0 0
  %1270 = vmatprep.subr.bf16.mxu0 0
  %1271 = vmatpush1.bf16.msra.mxu0 0
  %1272 = vmatprep.mubr.bf16.mxu0 0
  %1273 = vmatmul.mubr.bf16.gmra.mrb[0].mxu0 %v128
  %v1274 = vpop.f32.mrb[0].mxu0
  %v1275 = vadd.f32 %v1224, %v1274
  %v1276 = vpop.f32.mrb[0].mxu0
  %v1277 = vpop.f32.mrb[0].mxu0
  %v1278 = vadd.f32 %v1225, %v1277
  %v1279 = vpop.f32.mrb[0].mxu0
  %1280 = vmatprep.mubr.bf16.mxu0 0
  %1281 = vmatmul.mubr.bf16.gmra.mrb[0].mxu0 %v129
  %v1282 = vpop.f32.mrb[0].mxu0
  %v1283 = vadd.f32 %v1226, %v1282
  %v1284 = vpop.f32.mrb[0].mxu0
  %v1285 = vpop.f32.mrb[0].mxu0
  %v1286 = vadd.f32 %v1227, %v1285
  %v1287 = vpop.f32.mrb[0].mxu0
  %1288 = vmatprep.mubr.bf16.mxu0 0
  %1289 = vmatmul.mubr.bf16.gmra.mrb[0].mxu0 %v130
  %v1290 = vpop.f32.mrb[0].mxu0
  %v1291 = vadd.f32 %v1228, %v1290
  %v1292 = vpop.f32.mrb[0].mxu0
  %v1293 = vpop.f32.mrb[0].mxu0
  %v1294 = vadd.f32 %v1229, %v1293
  %v1295 = vpop.f32.mrb[0].mxu0
  %1296 = vmatprep.mubr.bf16.mxu0 0
  %1297 = vmatmul.mubr.bf16.gmra.mrb[0].mxu0 %v131
  %v1298 = vpop.f32.mrb[0].mxu0
  %v1299 = vadd.f32 %v1230, %v1298
  %v1300 = vpop.f32.mrb[0].mxu0
  %v1301 = vpop.f32.mrb[0].mxu0
  %v1302 = vadd.f32 %v1231, %v1301
  %v1303 = vpop.f32.mrb[0].mxu0
  %1304 = vmatprep.mubr.bf16.mxu0 0
  %1305 = vmatmul.mubr.bf16.gmra.mrb[0].mxu0 %v132
  %v1306 = vpop.f32.mrb[0].mxu0
  %v1307 = vadd.f32 %v1232, %v1306
  %v1308 = vpop.f32.mrb[0].mxu0
  %v1309 = vpop.f32.mrb[0].mxu0
  %v1310 = vadd.f32 %v1233, %v1309
  %v1311 = vpop.f32.mrb[0].mxu0
  %1312 = vmatprep.mubr.bf16.mxu0 0
  %1313 = vmatmul.mubr.bf16.gmra.mrb[0].mxu0 %v133
  %v1314 = vpop.f32.mrb[0].mxu0
  %v1315 = vadd.f32 %v1234, %v1314
  %v1316 = vpop.f32.mrb[0].mxu0
  %v1317 = vpop.f32.mrb[0].mxu0
  %v1318 = vadd.f32 %v1235, %v1317
  %v1319 = vpop.f32.mrb[0].mxu0
  %1320 = vmatprep.mubr.bf16.mxu0 0
  %1321 = vmatmul.mubr.bf16.gmra.mrb[0].mxu0 %v134
  %v1322 = vpop.f32.mrb[0].mxu0
  %v1323 = vadd.f32 %v1236, %v1322
  %v1324 = vpop.f32.mrb[0].mxu0
  %v1325 = vpop.f32.mrb[0].mxu0
  %v1326 = vadd.f32 %v1237, %v1325
  %v1327 = vpop.f32.mrb[0].mxu0
  %1328 = vmatprep.mubr.bf16.mxu0 0
  %1329 = vmatmul.mubr.bf16.gmra.mrb[0].mxu0 %v135
  %v1330 = vpop.f32.mrb[0].mxu0
  %v1331 = vadd.f32 %v1238, %v1330
  %v1332 = vpop.f32.mrb[0].mxu0
  %v1333 = vpop.f32.mrb[0].mxu0
  %v1334 = vadd.f32 %v1239, %v1333
  %v1335 = vpop.f32.mrb[0].mxu0
  %1336 = vdwg.mxu0
  %v1337 = vpack.c.bf16 %v1278, %v1275
  %v1338 = vpack.c.bf16 %v1286, %v1283
  %v1339 = vpack.c.bf16 %v1294, %v1291
  %v1340 = vpack.c.bf16 %v1302, %v1299
  %v1341 = vpack.c.bf16 %v1310, %v1307
  %v1342 = vpack.c.bf16 %v1318, %v1315
  %v1343 = vpack.c.bf16 %v1326, %v1323
  %v1344 = vpack.c.bf16 %v1334, %v1331
  %s1345 = scalar_lea.vmem %s3, 128
  %v1346 = vld [vmem:[%s1345] sm:$0xf]
  %v1347 = vld [vmem:[%s1345 + $0x4] sm:$0xf]
  %v1348 = vld [vmem:[%s1345 + $0x8] sm:$0xf]
  %v1349 = vld [vmem:[%s1345 + $0xc] sm:$0xf]
  %v1350 = vld [vmem:[%s1345 + $0x10] sm:$0xf]
  %v1351 = vld [vmem:[%s1345 + $0x14] sm:$0xf]
  %v1352 = vld [vmem:[%s1345 + $0x18] sm:$0xf]
  %v1353 = vld [vmem:[%s1345 + $0x1c] sm:$0xf]
  %v1354 = vld [vmem:[%s1345 + $0x20] sm:$0xf]
  %v1355 = vld [vmem:[%s1345 + $0x24] sm:$0xf]
  %v1356 = vld [vmem:[%s1345 + $0x28] sm:$0xf]
  %v1357 = vld [vmem:[%s1345 + $0x2c] sm:$0xf]
  %v1358 = vld [vmem:[%s1345 + $0x30] sm:$0xf]
  %v1359 = vld [vmem:[%s1345 + $0x34] sm:$0xf]
  %v1360 = vld [vmem:[%s1345 + $0x38] sm:$0xf]
  %v1361 = vld [vmem:[%s1345 + $0x3c] sm:$0xf]
  %s1362 = scalar_lea.vmem %s4, 2
  %v1363 = vld [vmem:[%s1362] sm:$0x1]
  %v1365 = vlaneseq
  %v1366 = vshrl.u32 %v1365, 7
  %v1367 = vsub.s32 0, %v1366
  %v1368 = vrot.slane %v1363, %v1367
  %v1386 = vunpack.c.l.b16 %v1346
  %v1387 = vunpack.c.l.b16 %v1347
  %v1388 = vunpack.c.l.b16 %v1348
  %v1389 = vunpack.c.l.b16 %v1349
  %v1390 = vunpack.c.l.b16 %v1350
  %v1391 = vunpack.c.l.b16 %v1351
  %v1392 = vunpack.c.l.b16 %v1352
  %v1393 = vunpack.c.l.b16 %v1353
  %v1394 = vunpack.c.l.b16 %v1354
  %v1395 = vunpack.c.l.b16 %v1355
  %v1396 = vunpack.c.l.b16 %v1356
  %v1397 = vunpack.c.l.b16 %v1357
  %v1398 = vunpack.c.l.b16 %v1358
  %v1399 = vunpack.c.l.b16 %v1359
  %v1400 = vunpack.c.l.b16 %v1360
  %v1401 = vunpack.c.l.b16 %v1361
  %v1402 = vpack.c.b16 %v1387, %v1386
  %v1403 = vpack.c.b16 %v1389, %v1388
  %v1404 = vpack.c.b16 %v1391, %v1390
  %v1405 = vpack.c.b16 %v1393, %v1392
  %v1406 = vpack.c.b16 %v1395, %v1394
  %v1407 = vpack.c.b16 %v1397, %v1396
  %v1408 = vpack.c.b16 %v1399, %v1398
  %v1409 = vpack.c.b16 %v1401, %v1400
  %1418 = vmatprep.subr.bf16.mxu0 0
  %1419 = vmatpush1.bf16.msra.mxu0 %v1402
  %1420 = vmatprep.subr.bf16.mxu0 0
  %1421 = vmatpush1.bf16.msra.mxu0 %v1403
  %1422 = vmatprep.subr.bf16.mxu0 0
  %1423 = vmatpush1.bf16.msra.mxu0 %v1404
  %1424 = vmatprep.subr.bf16.mxu0 0
  %1425 = vmatpush1.bf16.msra.mxu0 %v1405
  %1426 = vmatprep.subr.bf16.mxu0 0
  %1427 = vmatpush1.bf16.msra.mxu0 %v1406
  %1428 = vmatprep.subr.bf16.mxu0 0
  %1429 = vmatpush1.bf16.msra.mxu0 %v1407
  %1430 = vmatprep.subr.bf16.mxu0 0
  %1431 = vmatpush1.bf16.msra.mxu0 %v1408
  %1432 = vmatprep.subr.bf16.mxu0 0
  %1433 = vmatpush1.bf16.msra.mxu0 %v1409
  %1434 = vmatprep.subr.bf16.mxu0 0
  %1435 = vmatpush1.bf16.msra.mxu0 0
  %1436 = vmatprep.subr.bf16.mxu0 0
  %1437 = vmatpush1.bf16.msra.mxu0 0
  %1438 = vmatprep.subr.bf16.mxu0 0
  %1439 = vmatpush1.bf16.msra.mxu0 0
  %1440 = vmatprep.subr.bf16.mxu0 0
  %1441 = vmatpush1.bf16.msra.mxu0 0
  %1442 = vmatprep.subr.bf16.mxu0 0
  %1443 = vmatpush1.bf16.msra.mxu0 0
  %1444 = vmatprep.subr.bf16.mxu0 0
  %1445 = vmatpush1.bf16.msra.mxu0 0
  %1446 = vmatprep.subr.bf16.mxu0 0
  %1447 = vmatpush1.bf16.msra.mxu0 0
  %1448 = vmatprep.subr.bf16.mxu0 0
  %1449 = vmatpush1.bf16.msra.mxu0 0
  %1450 = vmatprep.mubr.bf16.mxu0 0
  %1451 = vmatmul.mubr.bf16.gmra.mrb[0].mxu0 %v1337
  %v1452 = vpop.f32.mrb[0].mxu0
  %v1453 = vadd.f32 %v1368, %v1452
  %v1454 = vpop.f32.mrb[0].mxu0
  %v1455 = vpop.f32.mrb[0].mxu0
  %v1456 = vadd.f32 %v1368, %v1455
  %v1457 = vpop.f32.mrb[0].mxu0
  %1458 = vmatprep.mubr.bf16.mxu0 0
  %1459 = vmatmul.mubr.bf16.gmra.mrb[0].mxu0 %v1338
  %v1460 = vpop.f32.mrb[0].mxu0
  %v1461 = vadd.f32 %v1368, %v1460
  %v1462 = vpop.f32.mrb[0].mxu0
  %v1463 = vpop.f32.mrb[0].mxu0
  %v1464 = vadd.f32 %v1368, %v1463
  %v1465 = vpop.f32.mrb[0].mxu0
  %1466 = vmatprep.mubr.bf16.mxu0 0
  %1467 = vmatmul.mubr.bf16.gmra.mrb[0].mxu0 %v1339
  %v1468 = vpop.f32.mrb[0].mxu0
  %v1469 = vadd.f32 %v1368, %v1468
  %v1470 = vpop.f32.mrb[0].mxu0
  %v1471 = vpop.f32.mrb[0].mxu0
  %v1472 = vadd.f32 %v1368, %v1471
  %v1473 = vpop.f32.mrb[0].mxu0
  %1474 = vmatprep.mubr.bf16.mxu0 0
  %1475 = vmatmul.mubr.bf16.gmra.mrb[0].mxu0 %v1340
  %v1476 = vpop.f32.mrb[0].mxu0
  %v1477 = vadd.f32 %v1368, %v1476
  %v1478 = vpop.f32.mrb[0].mxu0
  %v1479 = vpop.f32.mrb[0].mxu0
  %v1480 = vadd.f32 %v1368, %v1479
  %v1481 = vpop.f32.mrb[0].mxu0
  %1482 = vmatprep.mubr.bf16.mxu0 0
  %1483 = vmatmul.mubr.bf16.gmra.mrb[0].mxu0 %v1341
  %v1484 = vpop.f32.mrb[0].mxu0
  %v1485 = vadd.f32 %v1368, %v1484
  %v1486 = vpop.f32.mrb[0].mxu0
  %v1487 = vpop.f32.mrb[0].mxu0
  %v1488 = vadd.f32 %v1368, %v1487
  %v1489 = vpop.f32.mrb[0].mxu0
  %1490 = vmatprep.mubr.bf16.mxu0 0
  %1491 = vmatmul.mubr.bf16.gmra.mrb[0].mxu0 %v1342
  %v1492 = vpop.f32.mrb[0].mxu0
  %v1493 = vadd.f32 %v1368, %v1492
  %v1494 = vpop.f32.mrb[0].mxu0
  %v1495 = vpop.f32.mrb[0].mxu0
  %v1496 = vadd.f32 %v1368, %v1495
  %v1497 = vpop.f32.mrb[0].mxu0
  %1498 = vmatprep.mubr.bf16.mxu0 0
  %1499 = vmatmul.mubr.bf16.gmra.mrb[0].mxu0 %v1343
  %v1500 = vpop.f32.mrb[0].mxu0
  %v1501 = vadd.f32 %v1368, %v1500
  %v1502 = vpop.f32.mrb[0].mxu0
  %v1503 = vpop.f32.mrb[0].mxu0
  %v1504 = vadd.f32 %v1368, %v1503
  %v1505 = vpop.f32.mrb[0].mxu0
  %1506 = vmatprep.mubr.bf16.mxu0 0
  %1507 = vmatmul.mubr.bf16.gmra.mrb[0].mxu0 %v1344
  %v1508 = vpop.f32.mrb[0].mxu0
  %v1509 = vadd.f32 %v1368, %v1508
  %v1510 = vpop.f32.mrb[0].mxu0
  %v1511 = vpop.f32.mrb[0].mxu0
  %v1512 = vadd.f32 %v1368, %v1511
  %v1513 = vpop.f32.mrb[0].mxu0
  %1514 = vdwg.mxu0
  %v1515 = vmax.f32 %v1453, 0.0
  %v1516 = vmax.f32 %v1456, 0.0
  %v1517 = vmax.f32 %v1461, 0.0
  %v1518 = vmax.f32 %v1464, 0.0
  %v1519 = vmax.f32 %v1469, 0.0
  %v1520 = vmax.f32 %v1472, 0.0
  %v1521 = vmax.f32 %v1477, 0.0
  %v1522 = vmax.f32 %v1480, 0.0
  %v1523 = vmax.f32 %v1485, 0.0
  %v1524 = vmax.f32 %v1488, 0.0
  %v1525 = vmax.f32 %v1493, 0.0
  %v1526 = vmax.f32 %v1496, 0.0
  %v1527 = vmax.f32 %v1501, 0.0
  %v1528 = vmax.f32 %v1504, 0.0
  %v1529 = vmax.f32 %v1509, 0.0
  %v1530 = vmax.f32 %v1512, 0.0
  %v1531 = vpack.c.bf16 %v1516, %v1515
  %v1532 = vpack.c.bf16 %v1518, %v1517
  %v1533 = vpack.c.bf16 %v1520, %v1519
  %v1534 = vpack.c.bf16 %v1522, %v1521
  %v1535 = vpack.c.bf16 %v1524, %v1523
  %v1536 = vpack.c.bf16 %v1526, %v1525
  %v1537 = vpack.c.bf16 %v1528, %v1527
  %v1538 = vpack.c.bf16 %v1530, %v1529
  %s1539 = scalar_lea.vmem %s5, 128
  %v1540 = vld [vmem:[%s1539] sm:$0xf]
  %v1541 = vld [vmem:[%s1539 + $0x4] sm:$0xf]
  %v1542 = vld [vmem:[%s1539 + $0x8] sm:$0xf]
  %v1543 = vld [vmem:[%s1539 + $0xc] sm:$0xf]
  %v1544 = vld [vmem:[%s1539 + $0x10] sm:$0xf]
  %v1545 = vld [vmem:[%s1539 + $0x14] sm:$0xf]
  %v1546 = vld [vmem:[%s1539 + $0x18] sm:$0xf]
  %v1547 = vld [vmem:[%s1539 + $0x1c] sm:$0xf]
  %v1548 = vld [vmem:[%s1539 + $0x20] sm:$0xf]
  %v1549 = vld [vmem:[%s1539 + $0x24] sm:$0xf]
  %v1550 = vld [vmem:[%s1539 + $0x28] sm:$0xf]
  %v1551 = vld [vmem:[%s1539 + $0x2c] sm:$0xf]
  %v1552 = vld [vmem:[%s1539 + $0x30] sm:$0xf]
  %v1553 = vld [vmem:[%s1539 + $0x34] sm:$0xf]
  %v1554 = vld [vmem:[%s1539 + $0x38] sm:$0xf]
  %v1555 = vld [vmem:[%s1539 + $0x3c] sm:$0xf]
  %s1556 = scalar_lea.vmem %s6, 2
  %v1557 = vld [vmem:[%s1556] sm:$0x1]
  %v1559 = vlaneseq
  %v1560 = vshrl.u32 %v1559, 7
  %v1561 = vsub.s32 0, %v1560
  %v1562 = vrot.slane %v1557, %v1561
  %v1580 = vunpack.c.l.b16 %v1540
  %v1581 = vunpack.c.l.b16 %v1541
  %v1582 = vunpack.c.l.b16 %v1542
  %v1583 = vunpack.c.l.b16 %v1543
  %v1584 = vunpack.c.l.b16 %v1544
  %v1585 = vunpack.c.l.b16 %v1545
  %v1586 = vunpack.c.l.b16 %v1546
  %v1587 = vunpack.c.l.b16 %v1547
  %v1588 = vunpack.c.l.b16 %v1548
  %v1589 = vunpack.c.l.b16 %v1549
  %v1590 = vunpack.c.l.b16 %v1550
  %v1591 = vunpack.c.l.b16 %v1551
  %v1592 = vunpack.c.l.b16 %v1552
  %v1593 = vunpack.c.l.b16 %v1553
  %v1594 = vunpack.c.l.b16 %v1554
  %v1595 = vunpack.c.l.b16 %v1555
  %v1596 = vpack.c.b16 %v1581, %v1580
  %v1597 = vpack.c.b16 %v1583, %v1582
  %v1598 = vpack.c.b16 %v1585, %v1584
  %v1599 = vpack.c.b16 %v1587, %v1586
  %v1600 = vpack.c.b16 %v1589, %v1588
  %v1601 = vpack.c.b16 %v1591, %v1590
  %v1602 = vpack.c.b16 %v1593, %v1592
  %v1603 = vpack.c.b16 %v1595, %v1594
  %1612 = vmatprep.subr.bf16.mxu0 0
  %1613 = vmatpush1.bf16.msra.mxu0 %v1596
  %1614 = vmatprep.subr.bf16.mxu0 0
  %1615 = vmatpush1.bf16.msra.mxu0 %v1597
  %1616 = vmatprep.subr.bf16.mxu0 0
  %1617 = vmatpush1.bf16.msra.mxu0 %v1598
  %1618 = vmatprep.subr.bf16.mxu0 0
  %1619 = vmatpush1.bf16.msra.mxu0 %v1599
  %1620 = vmatprep.subr.bf16.mxu0 0
  %1621 = vmatpush1.bf16.msra.mxu0 %v1600
  %1622 = vmatprep.subr.bf16.mxu0 0
  %1623 = vmatpush1.bf16.msra.mxu0 %v1601
  %1624 = vmatprep.subr.bf16.mxu0 0
  %1625 = vmatpush1.bf16.msra.mxu0 %v1602
  %1626 = vmatprep.subr.bf16.mxu0 0
  %1627 = vmatpush1.bf16.msra.mxu0 %v1603
  %1628 = vmatprep.subr.bf16.mxu0 0
  %1629 = vmatpush1.bf16.msra.mxu0 0
  %1630 = vmatprep.subr.bf16.mxu0 0
  %1631 = vmatpush1.bf16.msra.mxu0 0
  %1632 = vmatprep.subr.bf16.mxu0 0
  %1633 = vmatpush1.bf16.msra.mxu0 0
  %1634 = vmatprep.subr.bf16.mxu0 0
  %1635 = vmatpush1.bf16.msra.mxu0 0
  %1636 = vmatprep.subr.bf16.mxu0 0
  %1637 = vmatpush1.bf16.msra.mxu0 0
  %1638 = vmatprep.subr.bf16.mxu0 0
  %1639 = vmatpush1.bf16.msra.mxu0 0
  %1640 = vmatprep.subr.bf16.mxu0 0
  %1641 = vmatpush1.bf16.msra.mxu0 0
  %1642 = vmatprep.subr.bf16.mxu0 0
  %1643 = vmatpush1.bf16.msra.mxu0 0
  %1644 = vmatprep.mubr.bf16.mxu0 0
  %1645 = vmatmul.mubr.bf16.gmra.mrb[0].mxu0 %v1531
  %v1646 = vpop.f32.mrb[0].mxu0
  %v1647 = vadd.f32 %v1562, %v1646
  %v1648 = vpop.f32.mrb[0].mxu0
  %v1649 = vpop.f32.mrb[0].mxu0
  %v1650 = vadd.f32 %v1562, %v1649
  %v1651 = vpop.f32.mrb[0].mxu0
  %1652 = vmatprep.mubr.bf16.mxu0 0
  %1653 = vmatmul.mubr.bf16.gmra.mrb[0].mxu0 %v1532
  %v1654 = vpop.f32.mrb[0].mxu0
  %v1655 = vadd.f32 %v1562, %v1654
  %v1656 = vpop.f32.mrb[0].mxu0
  %v1657 = vpop.f32.mrb[0].mxu0
  %v1658 = vadd.f32 %v1562, %v1657
  %v1659 = vpop.f32.mrb[0].mxu0
  %1660 = vmatprep.mubr.bf16.mxu0 0
  %1661 = vmatmul.mubr.bf16.gmra.mrb[0].mxu0 %v1533
  %v1662 = vpop.f32.mrb[0].mxu0
  %v1663 = vadd.f32 %v1562, %v1662
  %v1664 = vpop.f32.mrb[0].mxu0
  %v1665 = vpop.f32.mrb[0].mxu0
  %v1666 = vadd.f32 %v1562, %v1665
  %v1667 = vpop.f32.mrb[0].mxu0
  %1668 = vmatprep.mubr.bf16.mxu0 0
  %1669 = vmatmul.mubr.bf16.gmra.mrb[0].mxu0 %v1534
  %v1670 = vpop.f32.mrb[0].mxu0
  %v1671 = vadd.f32 %v1562, %v1670
  %v1672 = vpop.f32.mrb[0].mxu0
  %v1673 = vpop.f32.mrb[0].mxu0
  %v1674 = vadd.f32 %v1562, %v1673
  %v1675 = vpop.f32.mrb[0].mxu0
  %1676 = vmatprep.mubr.bf16.mxu0 0
  %1677 = vmatmul.mubr.bf16.gmra.mrb[0].mxu0 %v1535
  %v1678 = vpop.f32.mrb[0].mxu0
  %v1679 = vadd.f32 %v1562, %v1678
  %v1680 = vpop.f32.mrb[0].mxu0
  %v1681 = vpop.f32.mrb[0].mxu0
  %v1682 = vadd.f32 %v1562, %v1681
  %v1683 = vpop.f32.mrb[0].mxu0
  %1684 = vmatprep.mubr.bf16.mxu0 0
  %1685 = vmatmul.mubr.bf16.gmra.mrb[0].mxu0 %v1536
  %v1686 = vpop.f32.mrb[0].mxu0
  %v1687 = vadd.f32 %v1562, %v1686
  %v1688 = vpop.f32.mrb[0].mxu0
  %v1689 = vpop.f32.mrb[0].mxu0
  %v1690 = vadd.f32 %v1562, %v1689
  %v1691 = vpop.f32.mrb[0].mxu0
  %1692 = vmatprep.mubr.bf16.mxu0 0
  %1693 = vmatmul.mubr.bf16.gmra.mrb[0].mxu0 %v1537
  %v1694 = vpop.f32.mrb[0].mxu0
  %v1695 = vadd.f32 %v1562, %v1694
  %v1696 = vpop.f32.mrb[0].mxu0
  %v1697 = vpop.f32.mrb[0].mxu0
  %v1698 = vadd.f32 %v1562, %v1697
  %v1699 = vpop.f32.mrb[0].mxu0
  %1700 = vmatprep.mubr.bf16.mxu0 0
  %1701 = vmatmul.mubr.bf16.gmra.mrb[0].mxu0 %v1538
  %v1702 = vpop.f32.mrb[0].mxu0
  %v1703 = vadd.f32 %v1562, %v1702
  %v1704 = vpop.f32.mrb[0].mxu0
  %v1705 = vpop.f32.mrb[0].mxu0
  %v1706 = vadd.f32 %v1562, %v1705
  %v1707 = vpop.f32.mrb[0].mxu0
  %1708 = vdwg.mxu0
  %1709 = vst [vmem:[%s9] sm:$0xff] %v1647
  %1710 = vst [vmem:[%s9 + $0x8] sm:$0xff] %v1650
  %1711 = vst [vmem:[%s9 + $0x10] sm:$0xff] %v1655
  %1712 = vst [vmem:[%s9 + $0x18] sm:$0xff] %v1658
  %1713 = vst [vmem:[%s9 + $0x20] sm:$0xff] %v1663
  %1714 = vst [vmem:[%s9 + $0x28] sm:$0xff] %v1666
  %1715 = vst [vmem:[%s9 + $0x30] sm:$0xff] %v1671
  %1716 = vst [vmem:[%s9 + $0x38] sm:$0xff] %v1674
  %1717 = vst [vmem:[%s9 + $0x40] sm:$0xff] %v1679
  %1718 = vst [vmem:[%s9 + $0x48] sm:$0xff] %v1682
  %1719 = vst [vmem:[%s9 + $0x50] sm:$0xff] %v1687
  %1720 = vst [vmem:[%s9 + $0x58] sm:$0xff] %v1690
  %1721 = vst [vmem:[%s9 + $0x60] sm:$0xff] %v1695
  %1722 = vst [vmem:[%s9 + $0x68] sm:$0xff] %v1698
  %1723 = vst [vmem:[%s9 + $0x70] sm:$0xff] %v1703
  %1724 = vst [vmem:[%s9 + $0x78] sm:$0xff] %v1706
  %v1725 = vld [vmem:[%s7] sm:$0xf]
  %v1726 = vpack.c.bf16 %v1650, %v1647
  %v1727 = vpack.c.bf16 %v1658, %v1655
  %v1728 = vpack.c.bf16 %v1666, %v1663
  %v1729 = vpack.c.bf16 %v1674, %v1671
  %v1730 = vpack.c.bf16 %v1682, %v1679
  %v1731 = vpack.c.bf16 %v1690, %v1687
  %v1732 = vpack.c.bf16 %v1698, %v1695
  %v1733 = vpack.c.bf16 %v1706, %v1703
  %1734 = vmatprep.subr.bf16.mxu0 0
  %1735 = vmatpush1.bf16.msra.mxu0 %v1726
  %1736 = vmatprep.subr.bf16.mxu0 0
  %1737 = vmatpush1.bf16.msra.mxu0 %v1727
  %1738 = vmatprep.subr.bf16.mxu0 0
  %1739 = vmatpush1.bf16.msra.mxu0 %v1728
  %1740 = vmatprep.subr.bf16.mxu0 0
  %1741 = vmatpush1.bf16.msra.mxu0 %v1729
  %1742 = vmatprep.subr.bf16.mxu0 0
  %1743 = vmatpush1.bf16.msra.mxu0 %v1730
  %1744 = vmatprep.subr.bf16.mxu0 0
  %1745 = vmatpush1.bf16.msra.mxu0 %v1731
  %1746 = vmatprep.subr.bf16.mxu0 0
  %1747 = vmatpush1.bf16.msra.mxu0 %v1732
  %1748 = vmatprep.subr.bf16.mxu0 0
  %1749 = vmatpush1.bf16.msra.mxu0 %v1733
  %1750 = vmatprep.subr.bf16.mxu0 0
  %1751 = vmatpush1.bf16.msra.mxu0 0
  %1752 = vmatprep.subr.bf16.mxu0 0
  %1753 = vmatpush1.bf16.msra.mxu0 0
  %1754 = vmatprep.subr.bf16.mxu0 0
  %1755 = vmatpush1.bf16.msra.mxu0 0
  %1756 = vmatprep.subr.bf16.mxu0 0
  %1757 = vmatpush1.bf16.msra.mxu0 0
  %1758 = vmatprep.subr.bf16.mxu0 0
  %1759 = vmatpush1.bf16.msra.mxu0 0
  %1760 = vmatprep.subr.bf16.mxu0 0
  %1761 = vmatpush1.bf16.msra.mxu0 0
  %1762 = vmatprep.subr.bf16.mxu0 0
  %1763 = vmatpush1.bf16.msra.mxu0 0
  %1764 = vmatprep.subr.bf16.mxu0 0
  %1765 = vmatpush1.bf16.msra.mxu0 0
  %1766 = vmatprep.mubr.bf16.mxu0 0
  %1767 = vmatmul.mubr.bf16.gmra.mrb[0].mxu0 %v1725
  %v1768 = vpop.f32.mrb[0].mxu0
  %v1769 = vadd.f32 0.0, %v1768
  %v1770 = vpop.f32.mrb[0].mxu0
  %v1771 = vpop.f32.mrb[0].mxu0
  %v1772 = vpop.f32.mrb[0].mxu0
  %1773 = vdwg.mxu0
  %1774 = vst [vmem:[%s8] sm:$0xff] %v1769
  // Predicated region
  $region34: #{gnn_graphmvp_forward.1} parent=0 // pred_check
    _
  $region35: #{gnn_graphmvp_forward.1} parent=0 // pred_check_branch
    %1776 = sbr.rel (0) target = $region37
  $region36: #{gnn_graphmvp_forward.1} parent=0 // pred_region
    _
  $region37: #{gnn_graphmvp_forward.1} parent=0 // pred_fallthru
    _
  // Predicated region
  $region38: #{gnn_graphmvp_forward.1} parent=0 // pred_check
    _
  $region39: #{gnn_graphmvp_forward.1} parent=0 // pred_check_branch
    %1778 = sbr.rel (0) target = $region41
  $region40: #{gnn_graphmvp_forward.1} parent=0 // pred_region
    _
  $region41: #{gnn_graphmvp_forward.1} parent=0 // pred_fallthru
    _
  // Predicated region
  $region42: #{gnn_graphmvp_forward.1} parent=0 // pred_check
    _
  $region43: #{gnn_graphmvp_forward.1} parent=0 // pred_check_branch
    %1780 = sbr.rel (0) target = $region45
  $region44: #{gnn_graphmvp_forward.1} parent=0 // pred_region
    _
  $region45: #{gnn_graphmvp_forward.1} parent=0 // pred_fallthru
    _
  // Predicated region
  $region46: #{gnn_graphmvp_forward.1} parent=0 // pred_check
    _
  $region47: #{gnn_graphmvp_forward.1} parent=0 // pred_check_branch
    %1782 = sbr.rel (0) target = $region49
  $region48: #{gnn_graphmvp_forward.1} parent=0 // pred_region
    _
  $region49: #{gnn_graphmvp_forward.1} parent=0 // pred_fallthru
    _

</llo_original>
